<compile_context>
chip_gen: v6e
topology: v6e:2x2x1
jax: 0.10.0
libtpu: 0.0.40
codegen_flags: <defaults>
</compile_context>

<pallas_src>
import jax
import jax.numpy as jnp
from jax.experimental import pallas as pl
from jax.experimental.pallas import tpu as pltpu

NUM_CLASSES = 5
FEAT_C = 576        # mobilenet_v3_small feature channels feeding the classifier
HIDDEN = 1024
PAD_CLS = 128       # lane-dense padded class dimension
NEG_BIAS = -1e30    # bias for padded (non-existent) classes -> exp() == 0 (must stay f32!)


def _tb_cap():
    """MXU-row-friendly batch-tile cap: 128 on v5e (4x128^2 MXU), 256 on v6e/v7x."""
    try:
        kind = jax.devices()[0].device_kind.lower()
    except Exception:
        return 256
    if "v5 lite" in kind or "v5e" in kind or "v5litepod" in kind:
        return 128
    return 256


_TB_CAP = _tb_cap()


def _pick_tb(B):
    def rup8(n):
        return max(8, ((n + 7) // 8) * 8)
    if B <= 16:
        return rup8(B)
    # Split the batch across >= 2 grid steps (keeps both v7x TensorCores busy via
    # the "parallel" grid axis) while staying within the MXU-row cap.
    return min(rup8(pl.cdiv(B, 2)), _TB_CAP)


def _resident_spec(shape):
    """Grid-invariant operand: constant index_map, single-buffered so no second
    VMEM copy is kept.  Falls back to the default spec if this JAX version's
    BlockSpec has no pipeline_mode kwarg."""
    idx = lambda *args: (0,) * len(shape)
    try:
        return pl.BlockSpec(shape, idx, pipeline_mode=pl.Buffered(1))
    except TypeError:
        return pl.BlockSpec(shape, idx)


def _head_kernel(pooled_ref, w1_ref, b1_ref, w2_ref, b2_ref, out_ref):
    # pooled_ref: (TB, 576) bf16 ; weights bf16 ; biases f32 ; out (TB, PAD_CLS) f32

    # Linear(576 -> 1024): bf16 operands on the MXU, f32 accumulation.
    h = jnp.dot(pooled_ref[...], w1_ref[...],
                preferred_element_type=jnp.float32) + b1_ref[...]        # (TB, 1024) f32

    # Hardswish: x * relu6(x + 3) / 6   (VPU, f32)
    h = h * jnp.clip(h + 3.0, 0.0, 6.0) * (1.0 / 6.0)

    # Dropout(p=0.5) is identity in eval mode.

    # Linear(1024 -> 128 padded classes): lane-dense output path.
    logits = jnp.dot(h.astype(jnp.bfloat16), w2_ref[...],
                     preferred_element_type=jnp.float32) + b2_ref[...]   # (TB, 128) f32

    # Softmax(dim=-1), numerically stable, exact normalization.
    # Padded classes carry NEG_BIAS (f32) -> exp == 0, never selected as the max.
    m = jnp.max(logits, axis=-1, keepdims=True)
    e = jnp.exp(logits - m)
    out_ref[...] = e / jnp.sum(e, axis=-1, keepdims=True)


@jax.jit
def model_finetune_head(feat_nchw, w1_bf16, b1, w2p_bf16, b2p):
    """feat_nchw: (B, 576, H, W) backbone feature map (NCHW, as produced by PyTorch).

    AdaptiveAvgPool2d(1) + flatten runs here in XLA (f32, contiguous spatial
    reduce, no transpose); the Pallas kernel handles the two Linears, Hardswish
    and Softmax on the tiny pooled (B, 576) matrix.
    """
    B, C, H, W = feat_nchw.shape
    assert C == FEAT_C

    # AdaptiveAvgPool2d(1) + flatten, in f32, then a single cast to bf16.
    pooled = jnp.mean(feat_nchw, axis=(2, 3)).astype(jnp.bfloat16)       # (B, 576) bf16

    TB = _pick_tb(B)
    B_pad = pl.cdiv(B, TB) * TB
    if B_pad != B:
        # Only the tiny pooled matrix is padded (B_pad x 576 bf16), not the feature map.
        pooled = jnp.pad(pooled, ((0, B_pad - B), (0, 0)))

    grid = (B_pad // TB,)

    out_padded = pl.pallas_call(
        _head_kernel,
        out_shape=jax.ShapeDtypeStruct((B_pad, PAD_CLS), jnp.float32),
        grid=grid,
        in_specs=[
            # pooled activations: streamed / double-buffered over the batch grid
            pl.BlockSpec((TB, C), lambda i: (i, 0)),
            # weights & biases: constant index_map, single-buffered, VMEM-resident
            _resident_spec((C, HIDDEN)),          # w1   (576, 1024) bf16
            _resident_spec((1, HIDDEN)),          # b1   (1, 1024)   f32
            _resident_spec((HIDDEN, PAD_CLS)),    # w2p  (1024, 128) bf16
            _resident_spec((1, PAD_CLS)),         # b2p  (1, 128)    f32
        ],
        out_specs=pl.BlockSpec((TB, PAD_CLS), lambda i: (i, 0)),
        compiler_params=pltpu.CompilerParams(
            dimension_semantics=("parallel",),
            vmem_limit_bytes=32 * 1024 * 1024,
        ),
    )(pooled, w1_bf16, b1, w2p_bf16, b2p)

    return out_padded[:B, :NUM_CLASSES]


def init_params(key):
    # Matches the module's re-init of every nn.Linear:
    #   weight ~ Normal(0, 0.01), bias = 0   (PyTorch Linear weight is (out, in))
    k1, k2 = jax.random.split(key)
    w1_t = jax.random.normal(k1, (HIDDEN, FEAT_C), jnp.float32) * 0.01       # (1024, 576)
    b1_t = jnp.zeros((HIDDEN,), jnp.float32)
    w2_t = jax.random.normal(k2, (NUM_CLASSES, HIDDEN), jnp.float32) * 0.01  # (5, 1024)
    b2_t = jnp.zeros((NUM_CLASSES,), jnp.float32)
    return w1_t, b1_t, w2_t, b2_t


def prepare_params(w1_t, b1_t, w2_t, b2_t):
    """Transpose / pad / cast PyTorch-layout params for the kernel."""
    w1 = jnp.asarray(w1_t).T.astype(jnp.bfloat16)                    # (576, 1024) bf16
    b1 = jnp.asarray(b1_t).reshape(1, HIDDEN).astype(jnp.float32)    # (1, 1024) f32
    w2 = jnp.asarray(w2_t).T.astype(jnp.float32)                     # (1024, 5)
    w2p = jnp.zeros((HIDDEN, PAD_CLS), jnp.float32).at[:, :NUM_CLASSES].set(w2)
    w2p = w2p.astype(jnp.bfloat16)                                   # (1024, 128) bf16
    b2p = jnp.full((1, PAD_CLS), NEG_BIAS, jnp.float32)
    b2p = b2p.at[0, :NUM_CLASSES].set(jnp.asarray(b2_t))             # (1, 128) f32
    # NEG_BIAS is only safe in f32; a bf16 cast would turn it into -inf.
    assert b2p.dtype == jnp.float32
    return w1, b1, w2p, b2p


def head_reference(feat_nchw, w1_t, b1_t, w2_t, b2_t):
    """Pure-JAX f32 reference of the PyTorch classifier head (eval mode)."""
    pooled = jnp.mean(feat_nchw, axis=(2, 3))                # AdaptiveAvgPool2d(1)+flatten
    h = pooled @ w1_t.T + b1_t
    h = h * jnp.clip(h + 3.0, 0.0, 6.0) / 6.0                # Hardswish
    logits = h @ w2_t.T + b2_t                               # Dropout = identity (eval)
    return jax.nn.softmax(logits, axis=-1)


if __name__ == "__main__":
    key = jax.random.PRNGKey(0)
    pkey, xkey = jax.random.split(key)
    w1_t, b1_t, w2_t, b2_t = init_params(pkey)
    w1, b1, w2p, b2p = prepare_params(w1_t, b1_t, w2_t, b2_t)

    # Small synthetic backbone feature map (B, 576, 4, 4) in NCHW.
    x = jax.random.normal(xkey, (2, FEAT_C, 4, 4), jnp.float32)

    out = model_finetune_head(x, w1, b1, w2p, b2p)
    out = jax.block_until_ready(out)

    # Sanity: shape, softmax rows sum to 1 (exact reciprocal), matches f32 reference.
    assert out.shape == (2, NUM_CLASSES)
    assert jnp.allclose(jnp.sum(out, axis=-1), 1.0, atol=1e-5)
    ref = head_reference(x, w1_t, b1_t, w2_t, b2_t)
    assert jnp.allclose(out, ref, atol=2e-2), (out, ref)
    print("KERNEL_OK")
</pallas_src>

<mosaic_0001>
module attributes {stable_mosaic.version = 11 : i64} {
  func.func @_head_kernel(%arg0: i32, %arg1: memref<8x576xbf16, #tpu.memory_space<vmem>>, %arg2: memref<576x1024xbf16, #tpu.memory_space<vmem>>, %arg3: memref<1x1024xf32, #tpu.memory_space<vmem>>, %arg4: memref<1024x128xbf16, #tpu.memory_space<vmem>>, %arg5: memref<1x128xf32, #tpu.memory_space<vmem>>, %arg6: memref<8x128xf32, #tpu.memory_space<vmem>>) attributes {dimension_semantics = [#tpu.dimension_semantics<parallel>], iteration_bounds = array<i64: 1>, scalar_prefetch = 0 : i64, scratch_operands = 0 : i64, tpu.core_type = #tpu.core_type<tc>, window_params = [{transform_indices = @transform_0, window_bounds = array<i64: 8, 576>}, {pipeline_mode = #tpu.pipeline_mode<synchronous>, transform_indices = @transform_1, window_bounds = array<i64: 576, 1024>}, {pipeline_mode = #tpu.pipeline_mode<synchronous>, transform_indices = @transform_2, window_bounds = array<i64: 1, 1024>}, {pipeline_mode = #tpu.pipeline_mode<synchronous>, transform_indices = @transform_3, window_bounds = array<i64: 1024, 128>}, {pipeline_mode = #tpu.pipeline_mode<synchronous>, transform_indices = @transform_4, window_bounds = array<i64: 1, 128>}, {transform_indices = @transform_5, window_bounds = array<i64: 8, 128>}]} {
    %c0 = arith.constant 0 : index
    %c0_0 = arith.constant 0 : index
    %0 = vector.load %arg1[%c0, %c0_0] : memref<8x576xbf16, #tpu.memory_space<vmem>>, vector<8x576xbf16>
    %c0_1 = arith.constant 0 : index
    %c0_2 = arith.constant 0 : index
    %1 = vector.load %arg2[%c0_1, %c0_2] : memref<576x1024xbf16, #tpu.memory_space<vmem>>, vector<576x1024xbf16>
    %cst = arith.constant dense<0.000000e+00> : vector<8x1024xf32>
    %2 = tpu.matmul %0, %1, %cst {dimension_numbers = #tpu.dot_dimension_numbers<[1], [0], [0], [1], [0, 0, 1, 1], [], []>} : vector<8x576xbf16>, vector<576x1024xbf16>, vector<8x1024xf32> -> vector<8x1024xf32>
    %c0_3 = arith.constant 0 : index
    %c0_4 = arith.constant 0 : index
    %3 = vector.load %arg3[%c0_3, %c0_4] : memref<1x1024xf32, #tpu.memory_space<vmem>>, vector<1x1024xf32>
    %4 = vector.broadcast %3 : vector<1x1024xf32> to vector<8x1024xf32>
    %5 = arith.addf %2, %4 : vector<8x1024xf32>
    %cst_5 = arith.constant 3.000000e+00 : f32
    %6 = vector.broadcast %cst_5 : f32 to vector<8x1024xf32>
    %7 = arith.addf %5, %6 : vector<8x1024xf32>
    %cst_6 = arith.constant 0.000000e+00 : f32
    %cst_7 = arith.constant 6.000000e+00 : f32
    %8 = vector.broadcast %cst_6 : f32 to vector<8x1024xf32>
    %9 = arith.maximumf %8, %7 : vector<8x1024xf32>
    %10 = vector.broadcast %cst_7 : f32 to vector<8x1024xf32>
    %11 = arith.minimumf %10, %9 : vector<8x1024xf32>
    %12 = arith.mulf %5, %11 : vector<8x1024xf32>
    %cst_8 = arith.constant 0.166666672 : f32
    %13 = vector.broadcast %cst_8 : f32 to vector<8x1024xf32>
    %14 = arith.mulf %12, %13 : vector<8x1024xf32>
    %15 = arith.truncf %14 : vector<8x1024xf32> to vector<8x1024xbf16>
    %c0_9 = arith.constant 0 : index
    %c0_10 = arith.constant 0 : index
    %16 = vector.load %arg4[%c0_9, %c0_10] : memref<1024x128xbf16, #tpu.memory_space<vmem>>, vector<1024x128xbf16>
    %cst_11 = arith.constant dense<0.000000e+00> : vector<8x128xf32>
    %17 = tpu.matmul %15, %16, %cst_11 {dimension_numbers = #tpu.dot_dimension_numbers<[1], [0], [0], [1], [0, 0, 1, 1], [], []>} : vector<8x1024xbf16>, vector<1024x128xbf16>, vector<8x128xf32> -> vector<8x128xf32>
    %c0_12 = arith.constant 0 : index
    %c0_13 = arith.constant 0 : index
    %18 = vector.load %arg5[%c0_12, %c0_13] : memref<1x128xf32, #tpu.memory_space<vmem>>, vector<1x128xf32>
    %19 = vector.broadcast %18 : vector<1x128xf32> to vector<8x128xf32>
    %20 = arith.addf %17, %19 : vector<8x128xf32>
    %cst_14 = arith.constant dense<0xFF800000> : vector<8xf32>
    %21 = vector.multi_reduction <maximumf>, %20, %cst_14 [1] : vector<8x128xf32> to vector<8xf32>
    %22 = vector.shape_cast %21 : vector<8xf32> to vector<8x1xf32>
    %23 = vector.broadcast %22 : vector<8x1xf32> to vector<8x128xf32>
    %24 = arith.subf %20, %23 : vector<8x128xf32>
    %25 = math.exp %24 : vector<8x128xf32>
    %cst_15 = arith.constant dense<0.000000e+00> : vector<8xf32>
    %26 = vector.multi_reduction <add>, %25, %cst_15 [1] : vector<8x128xf32> to vector<8xf32>
    %27 = vector.shape_cast %26 : vector<8xf32> to vector<8x1xf32>
    %28 = vector.broadcast %27 : vector<8x1xf32> to vector<8x128xf32>
    %29 = arith.divf %25, %28 : vector<8x128xf32>
    %c0_16 = arith.constant 0 : index
    %c0_17 = arith.constant 0 : index
    %30 = vector.load %arg6[%c0_16, %c0_17] : memref<8x128xf32, #tpu.memory_space<vmem>>, vector<8x128xf32>
    tpu.vector_store %arg6[%c0_16, %c0_17], %29 {strides = array<i32>} : memref<8x128xf32, #tpu.memory_space<vmem>>, vector<8x128xf32>,
    return
  }
  func.func @transform_0(%arg0: i32) -> (i32, i32) {
    %c0_i32 = arith.constant 0 : i32
    %c0_i32_0 = arith.constant 0 : i32
    return %arg0, %c0_i32 : i32, i32
  }
  func.func @transform_1(%arg0: i32) -> (i32, i32) {
    %c0_i32 = arith.constant 0 : i32
    %c0_i32_0 = arith.constant 0 : i32
    %c0_i32_1 = arith.constant 0 : i32
    return %c0_i32, %c0_i32_0 : i32, i32
  }
  func.func @transform_2(%arg0: i32) -> (i32, i32) {
    %c0_i32 = arith.constant 0 : i32
    %c0_i32_0 = arith.constant 0 : i32
    %c0_i32_1 = arith.constant 0 : i32
    return %c0_i32, %c0_i32_0 : i32, i32
  }
  func.func @transform_3(%arg0: i32) -> (i32, i32) {
    %c0_i32 = arith.constant 0 : i32
    %c0_i32_0 = arith.constant 0 : i32
    %c0_i32_1 = arith.constant 0 : i32
    return %c0_i32, %c0_i32_0 : i32, i32
  }
  func.func @transform_4(%arg0: i32) -> (i32, i32) {
    %c0_i32 = arith.constant 0 : i32
    %c0_i32_0 = arith.constant 0 : i32
    %c0_i32_1 = arith.constant 0 : i32
    return %c0_i32, %c0_i32_0 : i32, i32
  }
  func.func @transform_5(%arg0: i32) -> (i32, i32) {
    %c0_i32 = arith.constant 0 : i32
    %c0_i32_0 = arith.constant 0 : i32
    return %arg0, %c0_i32 : i32, i32
  }
}

</mosaic_0001>

<llo_original>
// kernel: model_finetune_head.1
$region0: #{model_finetune_head.1}
  #allocation0 [shape = 'u32[]', space=smem, size = 0x4, offset = 0x4, fixed_abs, tag = 'smem constant byte address 0x4 - core index']
  #allocation1 [shape = 'u32[144,128]{1,0:T(1,128)}', space=vmem, size = 0x12000, scoped, tag = 'internal scratch']
  %s0 = inlined_call_operand.vmem [shape: bf16[8,576], index: 0, kind: input, shape index: {}]
  %s1 = inlined_call_operand.hbm [shape: bf16[576,1024], index: 1, kind: input, shape index: {}]
  %s2 = inlined_call_operand.hbm [shape: f32[1,1024], index: 2, kind: input, shape index: {}]
  %s3 = inlined_call_operand.hbm [shape: bf16[1024,128], index: 3, kind: input, shape index: {}]
  %s4 = inlined_call_operand.hbm [shape: f32[1,128], index: 4, kind: input, shape index: {}]
  %s5 = inlined_call_operand.vmem [shape: f32[8,128], index: 5, kind: output, shape index: {}]
  %s6 = sld [smem:[#allocation0]]
  $region46: #{model_finetune_head.1} parent=0
    _
  %s8 = ssub.s32 1, %s6
  %s9 = scalar_select 0, %s8, %s6
  $region1: #{model_finetune_head.1} parent=0
    #allocation2 [shape = 'u8[1179648]{0}', space=vmem, size = 0x120000, scoped, tag = 'input window, operand 1, single buffered']
    #allocation3 [shape = 's32[1]{0}', space=sflag, size = 0x4, scoped, tag = 'scoped memory for model_finetune_head.1']
    #allocation4 [shape = 'u8[4096]{0}', space=vmem, size = 0x1000, scoped, tag = 'input window, operand 2, single buffered']
    #allocation5 [shape = 's32[1]{0}', space=sflag, size = 0x4, scoped, tag = 'scoped memory for model_finetune_head.1']
    #allocation6 [shape = 'u8[262144]{0}', space=vmem, size = 0x40000, scoped, tag = 'input window, operand 3, single buffered']
    #allocation7 [shape = 'u8[512]{0}', space=vmem, size = 0x400, scoped, tag = 'input window, operand 4, single buffered']
    #allocation8 [shape = 's32[1]{0}', space=sflag, size = 0x4, scoped, tag = 'scoped memory for model_finetune_head.1']
    %10 = vsyncpa [#allocation3], 0
    %11 = vsyncpa [#allocation5], 0
    %12 = vsyncpa [#allocation8], 0
    // Predicated region
    $region2: #{model_finetune_head.1} parent=1 // pred_check
      _
    $region3: #{model_finetune_head.1} parent=1 // pred_check_branch
      %14 = sbr.rel (0) target = $region5
    $region4: #{model_finetune_head.1} parent=1 // pred_region
      _
    $region5: #{model_finetune_head.1} parent=1 // pred_fallthru
      _
    // Predicated region
    $region6: #{model_finetune_head.1} parent=1 // pred_check
      _
    $region7: #{model_finetune_head.1} parent=1 // pred_check_branch
      %16 = sbr.rel (0) target = $region9
    $region8: #{model_finetune_head.1} parent=1 // pred_region
      %s18 = ssub.s32 36864, 36864
      %19 = vsyncadd [#allocation3], %s18
      %s20 = sshll.u32 [#allocation2], 4
      %s21 = int_to_ptr.vmem [resolvable:$true] %s20
      %26 = dma.hbm_to_vmem [thread:$0]  %s1, 36864, %s21, [#allocation3], 512, 512, 32
    $region9: #{model_finetune_head.1} parent=1 // pred_fallthru
      _
    // Predicated region
    $region10: #{model_finetune_head.1} parent=1 // pred_check
      _
    $region11: #{model_finetune_head.1} parent=1 // pred_check_branch
      %28 = sbr.rel (0) target = $region13
    $region12: #{model_finetune_head.1} parent=1 // pred_region
      %s30 = ssub.s32 128, 128
      %31 = vsyncadd [#allocation5], %s30
      %s33 = sshll.u32 [#allocation4], 4
      %s34 = int_to_ptr.vmem [resolvable:$true] %s33
      %36 = dma.hbm_to_vmem [thread:$0]  %s2, 128, %s34, [#allocation5]
    $region13: #{model_finetune_head.1} parent=1 // pred_fallthru
      _
    // Predicated region
    $region14: #{model_finetune_head.1} parent=1 // pred_check
      _
    $region15: #{model_finetune_head.1} parent=1 // pred_check_branch
      %38 = sbr.rel (0) target = $region17
    $region16: #{model_finetune_head.1} parent=1 // pred_region
      %s40 = ssub.s32 8192, 8192
      %41 = vsyncadd [#allocation5], %s40
      %s42 = sshll.u32 [#allocation6], 4
      %s43 = int_to_ptr.vmem [resolvable:$true] %s42
      %48 = dma.hbm_to_vmem [thread:$0]  %s3, 8192, %s43, [#allocation5], 64, 64, 4
    $region17: #{model_finetune_head.1} parent=1 // pred_fallthru
      _
    // Predicated region
    $region18: #{model_finetune_head.1} parent=1 // pred_check
      _
    $region19: #{model_finetune_head.1} parent=1 // pred_check_branch
      %50 = sbr.rel (0) target = $region21
    $region20: #{model_finetune_head.1} parent=1 // pred_region
      %s52 = ssub.s32 16, 16
      %53 = vsyncadd [#allocation8], %s52
      %s55 = sshll.u32 [#allocation7], 4
      %s56 = int_to_ptr.vmem [resolvable:$true] %s55
      %58 = dma.hbm_to_vmem [thread:$0]  %s4, 16, %s56, [#allocation8]
    $region21: #{model_finetune_head.1} parent=1 // pred_fallthru
      _
    // Predicated region
    $region22: #{model_finetune_head.1} parent=1 // pred_check
      _
    $region23: #{model_finetune_head.1} parent=1 // pred_check_branch
      %60 = sbr.rel (0) target = $region25
    $region24: #{model_finetune_head.1} parent=1 // pred_region
      %61 = dma.done [#allocation3], 36864
    $region25: #{model_finetune_head.1} parent=1 // pred_fallthru
      _
    // Predicated region
    $region26: #{model_finetune_head.1} parent=1 // pred_check
      _
    $region27: #{model_finetune_head.1} parent=1 // pred_check_branch
      %63 = sbr.rel (0) target = $region29
    $region28: #{model_finetune_head.1} parent=1 // pred_region
      %64 = dma.done [#allocation5], 128
    $region29: #{model_finetune_head.1} parent=1 // pred_fallthru
      _
    // Predicated region
    $region30: #{model_finetune_head.1} parent=1 // pred_check
      _
    $region31: #{model_finetune_head.1} parent=1 // pred_check_branch
      %66 = sbr.rel (0) target = $region33
    $region32: #{model_finetune_head.1} parent=1 // pred_region
      %67 = dma.done [#allocation5], 8192
    $region33: #{model_finetune_head.1} parent=1 // pred_fallthru
      _
    // Predicated region
    $region34: #{model_finetune_head.1} parent=1 // pred_check
      _
    $region35: #{model_finetune_head.1} parent=1 // pred_check_branch
      %69 = sbr.rel (0) target = $region37
    $region36: #{model_finetune_head.1} parent=1 // pred_region
      %70 = dma.done [#allocation8], 16
    $region37: #{model_finetune_head.1} parent=1 // pred_fallthru
      _
    %v72 = vld [vmem:[%s0] sm:$0xff]
    %v73 = vld [vmem:[%s0 + $0x8] sm:$0xff]
    %v74 = vld [vmem:[%s0 + $0x10] sm:$0xf]
    %v75 = vld [vmem:[#allocation2] sm:$0xff]
    %v76 = vld [vmem:[#allocation2 + $0x8] sm:$0xff]
    %v77 = vld [vmem:[#allocation2 + $0x10] sm:$0xff]
    %v78 = vld [vmem:[#allocation2 + $0x18] sm:$0xff]
    %v79 = vld [vmem:[#allocation2 + $0x20] sm:$0xff]
    %v80 = vld [vmem:[#allocation2 + $0x28] sm:$0xff]
    %v81 = vld [vmem:[#allocation2 + $0x30] sm:$0xff]
    %v82 = vld [vmem:[#allocation2 + $0x38] sm:$0xff]
    %v83 = vld [vmem:[#allocation2 + $0x40] sm:$0xff]
    %v84 = vld [vmem:[#allocation2 + $0x48] sm:$0xff]
    %v85 = vld [vmem:[#allocation2 + $0x50] sm:$0xff]
    %v86 = vld [vmem:[#allocation2 + $0x58] sm:$0xff]
    %v87 = vld [vmem:[#allocation2 + $0x60] sm:$0xff]
    %v88 = vld [vmem:[#allocation2 + $0x68] sm:$0xff]
    %v89 = vld [vmem:[#allocation2 + $0x70] sm:$0xff]
    %v90 = vld [vmem:[#allocation2 + $0x78] sm:$0xff]
    %v91 = vld [vmem:[#allocation2 + $0x80] sm:$0xff]
    %v92 = vld [vmem:[#allocation2 + $0x88] sm:$0xff]
    %v93 = vld [vmem:[#allocation2 + $0x90] sm:$0xff]
    %v94 = vld [vmem:[#allocation2 + $0x98] sm:$0xff]
    %v95 = vld [vmem:[#allocation2 + $0xa0] sm:$0xff]
    %v96 = vld [vmem:[#allocation2 + $0xa8] sm:$0xff]
    %v97 = vld [vmem:[#allocation2 + $0xb0] sm:$0xff]
    %v98 = vld [vmem:[#allocation2 + $0xb8] sm:$0xff]
    %v99 = vld [vmem:[#allocation2 + $0xc0] sm:$0xff]
    %v100 = vld [vmem:[#allocation2 + $0xc8] sm:$0xff]
    %v101 = vld [vmem:[#allocation2 + $0xd0] sm:$0xff]
    %v102 = vld [vmem:[#allocation2 + $0xd8] sm:$0xff]
    %v103 = vld [vmem:[#allocation2 + $0xe0] sm:$0xff]
    %v104 = vld [vmem:[#allocation2 + $0xe8] sm:$0xff]
    %v105 = vld [vmem:[#allocation2 + $0xf0] sm:$0xff]
    %v106 = vld [vmem:[#allocation2 + $0xf8] sm:$0xff]
    %v107 = vld [vmem:[#allocation2 + $0x100] sm:$0xff]
    %v108 = vld [vmem:[#allocation2 + $0x108] sm:$0xff]
    %v109 = vld [vmem:[#allocation2 + $0x110] sm:$0xff]
    %v110 = vld [vmem:[#allocation2 + $0x118] sm:$0xff]
    %v111 = vld [vmem:[#allocation2 + $0x120] sm:$0xff]
    %v112 = vld [vmem:[#allocation2 + $0x128] sm:$0xff]
    %v113 = vld [vmem:[#allocation2 + $0x130] sm:$0xff]
    %v114 = vld [vmem:[#allocation2 + $0x138] sm:$0xff]
    %v115 = vld [vmem:[#allocation2 + $0x140] sm:$0xff]
    %v116 = vld [vmem:[#allocation2 + $0x148] sm:$0xff]
    %v117 = vld [vmem:[#allocation2 + $0x150] sm:$0xff]
    %v118 = vld [vmem:[#allocation2 + $0x158] sm:$0xff]
    %v119 = vld [vmem:[#allocation2 + $0x160] sm:$0xff]
    %v120 = vld [vmem:[#allocation2 + $0x168] sm:$0xff]
    %v121 = vld [vmem:[#allocation2 + $0x170] sm:$0xff]
    %v122 = vld [vmem:[#allocation2 + $0x178] sm:$0xff]
    %v123 = vld [vmem:[#allocation2 + $0x180] sm:$0xff]
    %v124 = vld [vmem:[#allocation2 + $0x188] sm:$0xff]
    %v125 = vld [vmem:[#allocation2 + $0x190] sm:$0xff]
    %v126 = vld [vmem:[#allocation2 + $0x198] sm:$0xff]
    %v127 = vld [vmem:[#allocation2 + $0x1a0] sm:$0xff]
    %v128 = vld [vmem:[#allocation2 + $0x1a8] sm:$0xff]
    %v129 = vld [vmem:[#allocation2 + $0x1b0] sm:$0xff]
    %v130 = vld [vmem:[#allocation2 + $0x1b8] sm:$0xff]
    %v131 = vld [vmem:[#allocation2 + $0x1c0] sm:$0xff]
    %v132 = vld [vmem:[#allocation2 + $0x1c8] sm:$0xff]
    %v133 = vld [vmem:[#allocation2 + $0x1d0] sm:$0xff]
    %v134 = vld [vmem:[#allocation2 + $0x1d8] sm:$0xff]
    %v135 = vld [vmem:[#allocation2 + $0x1e0] sm:$0xff]
    %v136 = vld [vmem:[#allocation2 + $0x1e8] sm:$0xff]
    %v137 = vld [vmem:[#allocation2 + $0x1f0] sm:$0xff]
    %v138 = vld [vmem:[#allocation2 + $0x1f8] sm:$0xff]
    %v139 = vld [vmem:[#allocation2 + $0x200] sm:$0xff]
    %v140 = vld [vmem:[#allocation2 + $0x208] sm:$0xff]
    %v141 = vld [vmem:[#allocation2 + $0x210] sm:$0xff]
    %v142 = vld [vmem:[#allocation2 + $0x218] sm:$0xff]
    %v143 = vld [vmem:[#allocation2 + $0x220] sm:$0xff]
    %v144 = vld [vmem:[#allocation2 + $0x228] sm:$0xff]
    %v145 = vld [vmem:[#allocation2 + $0x230] sm:$0xff]
    %v146 = vld [vmem:[#allocation2 + $0x238] sm:$0xff]
    %v147 = vld [vmem:[#allocation2 + $0x240] sm:$0xff]
    %v148 = vld [vmem:[#allocation2 + $0x248] sm:$0xff]
    %v149 = vld [vmem:[#allocation2 + $0x250] sm:$0xff]
    %v150 = vld [vmem:[#allocation2 + $0x258] sm:$0xff]
    %v151 = vld [vmem:[#allocation2 + $0x260] sm:$0xff]
    %v152 = vld [vmem:[#allocation2 + $0x268] sm:$0xff]
    %v153 = vld [vmem:[#allocation2 + $0x270] sm:$0xff]
    %v154 = vld [vmem:[#allocation2 + $0x278] sm:$0xff]
    %v155 = vld [vmem:[#allocation2 + $0x280] sm:$0xff]
    %v156 = vld [vmem:[#allocation2 + $0x288] sm:$0xff]
    %v157 = vld [vmem:[#allocation2 + $0x290] sm:$0xff]
    %v158 = vld [vmem:[#allocation2 + $0x298] sm:$0xff]
    %v159 = vld [vmem:[#allocation2 + $0x2a0] sm:$0xff]
    %v160 = vld [vmem:[#allocation2 + $0x2a8] sm:$0xff]
    %v161 = vld [vmem:[#allocation2 + $0x2b0] sm:$0xff]
    %v162 = vld [vmem:[#allocation2 + $0x2b8] sm:$0xff]
    %v163 = vld [vmem:[#allocation2 + $0x2c0] sm:$0xff]
    %v164 = vld [vmem:[#allocation2 + $0x2c8] sm:$0xff]
    %v165 = vld [vmem:[#allocation2 + $0x2d0] sm:$0xff]
    %v166 = vld [vmem:[#allocation2 + $0x2d8] sm:$0xff]
    %v167 = vld [vmem:[#allocation2 + $0x2e0] sm:$0xff]
    %v168 = vld [vmem:[#allocation2 + $0x2e8] sm:$0xff]
    %v169 = vld [vmem:[#allocation2 + $0x2f0] sm:$0xff]
    %v170 = vld [vmem:[#allocation2 + $0x2f8] sm:$0xff]
    %v171 = vld [vmem:[#allocation2 + $0x300] sm:$0xff]
    %v172 = vld [vmem:[#allocation2 + $0x308] sm:$0xff]
    %v173 = vld [vmem:[#allocation2 + $0x310] sm:$0xff]
    %v174 = vld [vmem:[#allocation2 + $0x318] sm:$0xff]
    %v175 = vld [vmem:[#allocation2 + $0x320] sm:$0xff]
    %v176 = vld [vmem:[#allocation2 + $0x328] sm:$0xff]
    %v177 = vld [vmem:[#allocation2 + $0x330] sm:$0xff]
    %v178 = vld [vmem:[#allocation2 + $0x338] sm:$0xff]
    %v179 = vld [vmem:[#allocation2 + $0x340] sm:$0xff]
    %v180 = vld [vmem:[#allocation2 + $0x348] sm:$0xff]
    %v181 = vld [vmem:[#allocation2 + $0x350] sm:$0xff]
    %v182 = vld [vmem:[#allocation2 + $0x358] sm:$0xff]
    %v183 = vld [vmem:[#allocation2 + $0x360] sm:$0xff]
    %v184 = vld [vmem:[#allocation2 + $0x368] sm:$0xff]
    %v185 = vld [vmem:[#allocation2 + $0x370] sm:$0xff]
    %v186 = vld [vmem:[#allocation2 + $0x378] sm:$0xff]
    %v187 = vld [vmem:[#allocation2 + $0x380] sm:$0xff]
    %v188 = vld [vmem:[#allocation2 + $0x388] sm:$0xff]
    %v189 = vld [vmem:[#allocation2 + $0x390] sm:$0xff]
    %v190 = vld [vmem:[#allocation2 + $0x398] sm:$0xff]
    %v191 = vld [vmem:[#allocation2 + $0x3a0] sm:$0xff]
    %v192 = vld [vmem:[#allocation2 + $0x3a8] sm:$0xff]
    %v193 = vld [vmem:[#allocation2 + $0x3b0] sm:$0xff]
    %v194 = vld [vmem:[#allocation2 + $0x3b8] sm:$0xff]
    %v195 = vld [vmem:[#allocation2 + $0x3c0] sm:$0xff]
    %v196 = vld [vmem:[#allocation2 + $0x3c8] sm:$0xff]
    %v197 = vld [vmem:[#allocation2 + $0x3d0] sm:$0xff]
    %v198 = vld [vmem:[#allocation2 + $0x3d8] sm:$0xff]
    %v199 = vld [vmem:[#allocation2 + $0x3e0] sm:$0xff]
    %v200 = vld [vmem:[#allocation2 + $0x3e8] sm:$0xff]
    %v201 = vld [vmem:[#allocation2 + $0x3f0] sm:$0xff]
    %v202 = vld [vmem:[#allocation2 + $0x3f8] sm:$0xff]
    %v203 = vld [vmem:[#allocation2 + $0x400] sm:$0xff]
    %v204 = vld [vmem:[#allocation2 + $0x408] sm:$0xff]
    %v205 = vld [vmem:[#allocation2 + $0x410] sm:$0xff]
    %v206 = vld [vmem:[#allocation2 + $0x418] sm:$0xff]
    %v207 = vld [vmem:[#allocation2 + $0x420] sm:$0xff]
    %v208 = vld [vmem:[#allocation2 + $0x428] sm:$0xff]
    %v209 = vld [vmem:[#allocation2 + $0x430] sm:$0xff]
    %v210 = vld [vmem:[#allocation2 + $0x438] sm:$0xff]
    %v211 = vld [vmem:[#allocation2 + $0x440] sm:$0xff]
    %v212 = vld [vmem:[#allocation2 + $0x448] sm:$0xff]
    %v213 = vld [vmem:[#allocation2 + $0x450] sm:$0xff]
    %v214 = vld [vmem:[#allocation2 + $0x458] sm:$0xff]
    %v215 = vld [vmem:[#allocation2 + $0x460] sm:$0xff]
    %v216 = vld [vmem:[#allocation2 + $0x468] sm:$0xff]
    %v217 = vld [vmem:[#allocation2 + $0x470] sm:$0xff]
    %v218 = vld [vmem:[#allocation2 + $0x478] sm:$0xff]
    %v219 = vld [vmem:[#allocation2 + $0x480] sm:$0xff]
    %v220 = vld [vmem:[#allocation2 + $0x488] sm:$0xff]
    %v221 = vld [vmem:[#allocation2 + $0x490] sm:$0xff]
    %v222 = vld [vmem:[#allocation2 + $0x498] sm:$0xff]
    %v223 = vld [vmem:[#allocation2 + $0x4a0] sm:$0xff]
    %v224 = vld [vmem:[#allocation2 + $0x4a8] sm:$0xff]
    %v225 = vld [vmem:[#allocation2 + $0x4b0] sm:$0xff]
    %v226 = vld [vmem:[#allocation2 + $0x4b8] sm:$0xff]
    %v227 = vld [vmem:[#allocation2 + $0x4c0] sm:$0xff]
    %v228 = vld [vmem:[#allocation2 + $0x4c8] sm:$0xff]
    %v229 = vld [vmem:[#allocation2 + $0x4d0] sm:$0xff]
    %v230 = vld [vmem:[#allocation2 + $0x4d8] sm:$0xff]
    %v231 = vld [vmem:[#allocation2 + $0x4e0] sm:$0xff]
    %v232 = vld [vmem:[#allocation2 + $0x4e8] sm:$0xff]
    %v233 = vld [vmem:[#allocation2 + $0x4f0] sm:$0xff]
    %v234 = vld [vmem:[#allocation2 + $0x4f8] sm:$0xff]
    %v235 = vld [vmem:[#allocation2 + $0x500] sm:$0xff]
    %v236 = vld [vmem:[#allocation2 + $0x508] sm:$0xff]
    %v237 = vld [vmem:[#allocation2 + $0x510] sm:$0xff]
    %v238 = vld [vmem:[#allocation2 + $0x518] sm:$0xff]
    %v239 = vld [vmem:[#allocation2 + $0x520] sm:$0xff]
    %v240 = vld [vmem:[#allocation2 + $0x528] sm:$0xff]
    %v241 = vld [vmem:[#allocation2 + $0x530] sm:$0xff]
    %v242 = vld [vmem:[#allocation2 + $0x538] sm:$0xff]
    %v243 = vld [vmem:[#allocation2 + $0x540] sm:$0xff]
    %v244 = vld [vmem:[#allocation2 + $0x548] sm:$0xff]
    %v245 = vld [vmem:[#allocation2 + $0x550] sm:$0xff]
    %v246 = vld [vmem:[#allocation2 + $0x558] sm:$0xff]
    %v247 = vld [vmem:[#allocation2 + $0x560] sm:$0xff]
    %v248 = vld [vmem:[#allocation2 + $0x568] sm:$0xff]
    %v249 = vld [vmem:[#allocation2 + $0x570] sm:$0xff]
    %v250 = vld [vmem:[#allocation2 + $0x578] sm:$0xff]
    %v251 = vld [vmem:[#allocation2 + $0x580] sm:$0xff]
    %v252 = vld [vmem:[#allocation2 + $0x588] sm:$0xff]
    %v253 = vld [vmem:[#allocation2 + $0x590] sm:$0xff]
    %v254 = vld [vmem:[#allocation2 + $0x598] sm:$0xff]
    %v255 = vld [vmem:[#allocation2 + $0x5a0] sm:$0xff]
    %v256 = vld [vmem:[#allocation2 + $0x5a8] sm:$0xff]
    %v257 = vld [vmem:[#allocation2 + $0x5b0] sm:$0xff]
    %v258 = vld [vmem:[#allocation2 + $0x5b8] sm:$0xff]
    %v259 = vld [vmem:[#allocation2 + $0x5c0] sm:$0xff]
    %v260 = vld [vmem:[#allocation2 + $0x5c8] sm:$0xff]
    %v261 = vld [vmem:[#allocation2 + $0x5d0] sm:$0xff]
    %v262 = vld [vmem:[#allocation2 + $0x5d8] sm:$0xff]
    %v263 = vld [vmem:[#allocation2 + $0x5e0] sm:$0xff]
    %v264 = vld [vmem:[#allocation2 + $0x5e8] sm:$0xff]
    %v265 = vld [vmem:[#allocation2 + $0x5f0] sm:$0xff]
    %v266 = vld [vmem:[#allocation2 + $0x5f8] sm:$0xff]
    %v267 = vld [vmem:[#allocation2 + $0x600] sm:$0xff]
    %v268 = vld [vmem:[#allocation2 + $0x608] sm:$0xff]
    %v269 = vld [vmem:[#allocation2 + $0x610] sm:$0xff]
    %v270 = vld [vmem:[#allocation2 + $0x618] sm:$0xff]
    %v271 = vld [vmem:[#allocation2 + $0x620] sm:$0xff]
    %v272 = vld [vmem:[#allocation2 + $0x628] sm:$0xff]
    %v273 = vld [vmem:[#allocation2 + $0x630] sm:$0xff]
    %v274 = vld [vmem:[#allocation2 + $0x638] sm:$0xff]
    %v275 = vld [vmem:[#allocation2 + $0x640] sm:$0xff]
    %v276 = vld [vmem:[#allocation2 + $0x648] sm:$0xff]
    %v277 = vld [vmem:[#allocation2 + $0x650] sm:$0xff]
    %v278 = vld [vmem:[#allocation2 + $0x658] sm:$0xff]
    %v279 = vld [vmem:[#allocation2 + $0x660] sm:$0xff]
    %v280 = vld [vmem:[#allocation2 + $0x668] sm:$0xff]
    %v281 = vld [vmem:[#allocation2 + $0x670] sm:$0xff]
    %v282 = vld [vmem:[#allocation2 + $0x678] sm:$0xff]
    %v283 = vld [vmem:[#allocation2 + $0x680] sm:$0xff]
    %v284 = vld [vmem:[#allocation2 + $0x688] sm:$0xff]
    %v285 = vld [vmem:[#allocation2 + $0x690] sm:$0xff]
    %v286 = vld [vmem:[#allocation2 + $0x698] sm:$0xff]
    %v287 = vld [vmem:[#allocation2 + $0x6a0] sm:$0xff]
    %v288 = vld [vmem:[#allocation2 + $0x6a8] sm:$0xff]
    %v289 = vld [vmem:[#allocation2 + $0x6b0] sm:$0xff]
    %v290 = vld [vmem:[#allocation2 + $0x6b8] sm:$0xff]
    %v291 = vld [vmem:[#allocation2 + $0x6c0] sm:$0xff]
    %v292 = vld [vmem:[#allocation2 + $0x6c8] sm:$0xff]
    %v293 = vld [vmem:[#allocation2 + $0x6d0] sm:$0xff]
    %v294 = vld [vmem:[#allocation2 + $0x6d8] sm:$0xff]
    %v295 = vld [vmem:[#allocation2 + $0x6e0] sm:$0xff]
    %v296 = vld [vmem:[#allocation2 + $0x6e8] sm:$0xff]
    %v297 = vld [vmem:[#allocation2 + $0x6f0] sm:$0xff]
    %v298 = vld [vmem:[#allocation2 + $0x6f8] sm:$0xff]
    %v299 = vld [vmem:[#allocation2 + $0x700] sm:$0xff]
    %v300 = vld [vmem:[#allocation2 + $0x708] sm:$0xff]
    %v301 = vld [vmem:[#allocation2 + $0x710] sm:$0xff]
    %v302 = vld [vmem:[#allocation2 + $0x718] sm:$0xff]
    %v303 = vld [vmem:[#allocation2 + $0x720] sm:$0xff]
    %v304 = vld [vmem:[#allocation2 + $0x728] sm:$0xff]
    %v305 = vld [vmem:[#allocation2 + $0x730] sm:$0xff]
    %v306 = vld [vmem:[#allocation2 + $0x738] sm:$0xff]
    %v307 = vld [vmem:[#allocation2 + $0x740] sm:$0xff]
    %v308 = vld [vmem:[#allocation2 + $0x748] sm:$0xff]
    %v309 = vld [vmem:[#allocation2 + $0x750] sm:$0xff]
    %v310 = vld [vmem:[#allocation2 + $0x758] sm:$0xff]
    %v311 = vld [vmem:[#allocation2 + $0x760] sm:$0xff]
    %v312 = vld [vmem:[#allocation2 + $0x768] sm:$0xff]
    %v313 = vld [vmem:[#allocation2 + $0x770] sm:$0xff]
    %v314 = vld [vmem:[#allocation2 + $0x778] sm:$0xff]
    %v315 = vld [vmem:[#allocation2 + $0x780] sm:$0xff]
    %v316 = vld [vmem:[#allocation2 + $0x788] sm:$0xff]
    %v317 = vld [vmem:[#allocation2 + $0x790] sm:$0xff]
    %v318 = vld [vmem:[#allocation2 + $0x798] sm:$0xff]
    %v319 = vld [vmem:[#allocation2 + $0x7a0] sm:$0xff]
    %v320 = vld [vmem:[#allocation2 + $0x7a8] sm:$0xff]
    %v321 = vld [vmem:[#allocation2 + $0x7b0] sm:$0xff]
    %v322 = vld [vmem:[#allocation2 + $0x7b8] sm:$0xff]
    %v323 = vld [vmem:[#allocation2 + $0x7c0] sm:$0xff]
    %v324 = vld [vmem:[#allocation2 + $0x7c8] sm:$0xff]
    %v325 = vld [vmem:[#allocation2 + $0x7d0] sm:$0xff]
    %v326 = vld [vmem:[#allocation2 + $0x7d8] sm:$0xff]
    %v327 = vld [vmem:[#allocation2 + $0x7e0] sm:$0xff]
    %v328 = vld [vmem:[#allocation2 + $0x7e8] sm:$0xff]
    %v329 = vld [vmem:[#allocation2 + $0x7f0] sm:$0xff]
    %v330 = vld [vmem:[#allocation2 + $0x7f8] sm:$0xff]
    %v331 = vld [vmem:[#allocation2 + $0x800] sm:$0xff]
    %v332 = vld [vmem:[#allocation2 + $0x808] sm:$0xff]
    %v333 = vld [vmem:[#allocation2 + $0x810] sm:$0xff]
    %v334 = vld [vmem:[#allocation2 + $0x818] sm:$0xff]
    %v335 = vld [vmem:[#allocation2 + $0x820] sm:$0xff]
    %v336 = vld [vmem:[#allocation2 + $0x828] sm:$0xff]
    %v337 = vld [vmem:[#allocation2 + $0x830] sm:$0xff]
    %v338 = vld [vmem:[#allocation2 + $0x838] sm:$0xff]
    %v339 = vld [vmem:[#allocation2 + $0x840] sm:$0xff]
    %v340 = vld [vmem:[#allocation2 + $0x848] sm:$0xff]
    %v341 = vld [vmem:[#allocation2 + $0x850] sm:$0xff]
    %v342 = vld [vmem:[#allocation2 + $0x858] sm:$0xff]
    %v343 = vld [vmem:[#allocation2 + $0x860] sm:$0xff]
    %v344 = vld [vmem:[#allocation2 + $0x868] sm:$0xff]
    %v345 = vld [vmem:[#allocation2 + $0x870] sm:$0xff]
    %v346 = vld [vmem:[#allocation2 + $0x878] sm:$0xff]
    %v347 = vld [vmem:[#allocation2 + $0x880] sm:$0xff]
    %v348 = vld [vmem:[#allocation2 + $0x888] sm:$0xff]
    %v349 = vld [vmem:[#allocation2 + $0x890] sm:$0xff]
    %v350 = vld [vmem:[#allocation2 + $0x898] sm:$0xff]
    %v351 = vld [vmem:[#allocation2 + $0x8a0] sm:$0xff]
    %v352 = vld [vmem:[#allocation2 + $0x8a8] sm:$0xff]
    %v353 = vld [vmem:[#allocation2 + $0x8b0] sm:$0xff]
    %v354 = vld [vmem:[#allocation2 + $0x8b8] sm:$0xff]
    %v355 = vld [vmem:[#allocation2 + $0x8c0] sm:$0xff]
    %v356 = vld [vmem:[#allocation2 + $0x8c8] sm:$0xff]
    %v357 = vld [vmem:[#allocation2 + $0x8d0] sm:$0xff]
    %v358 = vld [vmem:[#allocation2 + $0x8d8] sm:$0xff]
    %v359 = vld [vmem:[#allocation2 + $0x8e0] sm:$0xff]
    %v360 = vld [vmem:[#allocation2 + $0x8e8] sm:$0xff]
    %v361 = vld [vmem:[#allocation2 + $0x8f0] sm:$0xff]
    %v362 = vld [vmem:[#allocation2 + $0x8f8] sm:$0xff]
    %v363 = vld [vmem:[#allocation4] sm:$0xff]
    %v365 = vlaneseq
    %v366 = vshrl.u32 %v365, 7
    %v367 = vsub.s32 0, %v366
    %v368 = vrot.slane %v363, %v367
    %v369 = vlaneseq
    %v370 = vshrl.u32 %v369, 7
    %v371 = vsub.s32 1, %v370
    %v372 = vrot.slane %v363, %v371
    %v373 = vlaneseq
    %v374 = vshrl.u32 %v373, 7
    %v375 = vsub.s32 2, %v374
    %v376 = vrot.slane %v363, %v375
    %v377 = vlaneseq
    %v378 = vshrl.u32 %v377, 7
    %v379 = vsub.s32 3, %v378
    %v380 = vrot.slane %v363, %v379
    %v381 = vlaneseq
    %v382 = vshrl.u32 %v381, 7
    %v383 = vsub.s32 4, %v382
    %v384 = vrot.slane %v363, %v383
    %v385 = vlaneseq
    %v386 = vshrl.u32 %v385, 7
    %v387 = vsub.s32 5, %v386
    %v388 = vrot.slane %v363, %v387
    %v389 = vlaneseq
    %v390 = vshrl.u32 %v389, 7
    %v391 = vsub.s32 6, %v390
    %v392 = vrot.slane %v363, %v391
    %v393 = vlaneseq
    %v394 = vshrl.u32 %v393, 7
    %v395 = vsub.s32 7, %v394
    %v396 = vrot.slane %v363, %v395
    %v408 = vunpack.c.l.b16 %v72
    %v409 = vunpack.c.h.b16 %v72
    %v410 = vunpack.c.l.b16 %v73
    %v411 = vunpack.c.h.b16 %v73
    %v412 = vunpack.c.l.b16 %v74
    %v413 = vpack.c.b16 %v408, %v408
    %v414 = vpack.c.b16 %v409, %v409
    %v415 = vpack.c.b16 %v410, %v410
    %v416 = vpack.c.b16 %v411, %v411
    %v417 = vpack.c.b16 %v412, %v412
    %v710 = vunpack.c.l.b16 %v75
    %v711 = vunpack.c.h.b16 %v75
    %v712 = vunpack.c.l.b16 %v76
    %v713 = vunpack.c.h.b16 %v76
    %v714 = vunpack.c.l.b16 %v77
    %v715 = vunpack.c.h.b16 %v77
    %v716 = vunpack.c.l.b16 %v78
    %v717 = vunpack.c.h.b16 %v78
    %v718 = vunpack.c.l.b16 %v79
    %v719 = vunpack.c.h.b16 %v79
    %v720 = vunpack.c.l.b16 %v80
    %v721 = vunpack.c.h.b16 %v80
    %v722 = vunpack.c.l.b16 %v81
    %v723 = vunpack.c.h.b16 %v81
    %v724 = vunpack.c.l.b16 %v82
    %v725 = vunpack.c.h.b16 %v82
    %v726 = vunpack.c.l.b16 %v83
    %v727 = vunpack.c.h.b16 %v83
    %v728 = vunpack.c.l.b16 %v84
    %v729 = vunpack.c.h.b16 %v84
    %v730 = vunpack.c.l.b16 %v85
    %v731 = vunpack.c.h.b16 %v85
    %v732 = vunpack.c.l.b16 %v86
    %v733 = vunpack.c.h.b16 %v86
    %v734 = vunpack.c.l.b16 %v87
    %v735 = vunpack.c.h.b16 %v87
    %v736 = vunpack.c.l.b16 %v88
    %v737 = vunpack.c.h.b16 %v88
    %v738 = vunpack.c.l.b16 %v89
    %v739 = vunpack.c.h.b16 %v89
    %v740 = vunpack.c.l.b16 %v90
    %v741 = vunpack.c.h.b16 %v90
    %v742 = vunpack.c.l.b16 %v91
    %v743 = vunpack.c.h.b16 %v91
    %v744 = vunpack.c.l.b16 %v92
    %v745 = vunpack.c.h.b16 %v92
    %v746 = vunpack.c.l.b16 %v93
    %v747 = vunpack.c.h.b16 %v93
    %v748 = vunpack.c.l.b16 %v94
    %v749 = vunpack.c.h.b16 %v94
    %v750 = vunpack.c.l.b16 %v95
    %v751 = vunpack.c.h.b16 %v95
    %v752 = vunpack.c.l.b16 %v96
    %v753 = vunpack.c.h.b16 %v96
    %v754 = vunpack.c.l.b16 %v97
    %v755 = vunpack.c.h.b16 %v97
    %v756 = vunpack.c.l.b16 %v98
    %v757 = vunpack.c.h.b16 %v98
    %v758 = vunpack.c.l.b16 %v99
    %v759 = vunpack.c.h.b16 %v99
    %v760 = vunpack.c.l.b16 %v100
    %v761 = vunpack.c.h.b16 %v100
    %v762 = vunpack.c.l.b16 %v101
    %v763 = vunpack.c.h.b16 %v101
    %v764 = vunpack.c.l.b16 %v102
    %v765 = vunpack.c.h.b16 %v102
    %v766 = vunpack.c.l.b16 %v103
    %v767 = vunpack.c.h.b16 %v103
    %v768 = vunpack.c.l.b16 %v104
    %v769 = vunpack.c.h.b16 %v104
    %v770 = vunpack.c.l.b16 %v105
    %v771 = vunpack.c.h.b16 %v105
    %v772 = vunpack.c.l.b16 %v106
    %v773 = vunpack.c.h.b16 %v106
    %v774 = vunpack.c.l.b16 %v107
    %v775 = vunpack.c.h.b16 %v107
    %v776 = vunpack.c.l.b16 %v108
    %v777 = vunpack.c.h.b16 %v108
    %v778 = vunpack.c.l.b16 %v109
    %v779 = vunpack.c.h.b16 %v109
    %v780 = vunpack.c.l.b16 %v110
    %v781 = vunpack.c.h.b16 %v110
    %v782 = vunpack.c.l.b16 %v111
    %v783 = vunpack.c.h.b16 %v111
    %v784 = vunpack.c.l.b16 %v112
    %v785 = vunpack.c.h.b16 %v112
    %v786 = vunpack.c.l.b16 %v113
    %v787 = vunpack.c.h.b16 %v113
    %v788 = vunpack.c.l.b16 %v114
    %v789 = vunpack.c.h.b16 %v114
    %v790 = vunpack.c.l.b16 %v115
    %v791 = vunpack.c.h.b16 %v115
    %v792 = vunpack.c.l.b16 %v116
    %v793 = vunpack.c.h.b16 %v116
    %v794 = vunpack.c.l.b16 %v117
    %v795 = vunpack.c.h.b16 %v117
    %v796 = vunpack.c.l.b16 %v118
    %v797 = vunpack.c.h.b16 %v118
    %v798 = vunpack.c.l.b16 %v119
    %v799 = vunpack.c.h.b16 %v119
    %v800 = vunpack.c.l.b16 %v120
    %v801 = vunpack.c.h.b16 %v120
    %v802 = vunpack.c.l.b16 %v121
    %v803 = vunpack.c.h.b16 %v121
    %v804 = vunpack.c.l.b16 %v122
    %v805 = vunpack.c.h.b16 %v122
    %v806 = vunpack.c.l.b16 %v123
    %v807 = vunpack.c.h.b16 %v123
    %v808 = vunpack.c.l.b16 %v124
    %v809 = vunpack.c.h.b16 %v124
    %v810 = vunpack.c.l.b16 %v125
    %v811 = vunpack.c.h.b16 %v125
    %v812 = vunpack.c.l.b16 %v126
    %v813 = vunpack.c.h.b16 %v126
    %v814 = vunpack.c.l.b16 %v127
    %v815 = vunpack.c.h.b16 %v127
    %v816 = vunpack.c.l.b16 %v128
    %v817 = vunpack.c.h.b16 %v128
    %v818 = vunpack.c.l.b16 %v129
    %v819 = vunpack.c.h.b16 %v129
    %v820 = vunpack.c.l.b16 %v130
    %v821 = vunpack.c.h.b16 %v130
    %v822 = vunpack.c.l.b16 %v131
    %v823 = vunpack.c.h.b16 %v131
    %v824 = vunpack.c.l.b16 %v132
    %v825 = vunpack.c.h.b16 %v132
    %v826 = vunpack.c.l.b16 %v133
    %v827 = vunpack.c.h.b16 %v133
    %v828 = vunpack.c.l.b16 %v134
    %v829 = vunpack.c.h.b16 %v134
    %v830 = vunpack.c.l.b16 %v135
    %v831 = vunpack.c.h.b16 %v135
    %v832 = vunpack.c.l.b16 %v136
    %v833 = vunpack.c.h.b16 %v136
    %v834 = vunpack.c.l.b16 %v137
    %v835 = vunpack.c.h.b16 %v137
    %v836 = vunpack.c.l.b16 %v138
    %v837 = vunpack.c.h.b16 %v138
    %v838 = vunpack.c.l.b16 %v139
    %v839 = vunpack.c.h.b16 %v139
    %v840 = vunpack.c.l.b16 %v140
    %v841 = vunpack.c.h.b16 %v140
    %v842 = vunpack.c.l.b16 %v141
    %v843 = vunpack.c.h.b16 %v141
    %v844 = vunpack.c.l.b16 %v142
    %v845 = vunpack.c.h.b16 %v142
    %v846 = vunpack.c.l.b16 %v143
    %v847 = vunpack.c.h.b16 %v143
    %v848 = vunpack.c.l.b16 %v144
    %v849 = vunpack.c.h.b16 %v144
    %v850 = vunpack.c.l.b16 %v145
    %v851 = vunpack.c.h.b16 %v145
    %v852 = vunpack.c.l.b16 %v146
    %v853 = vunpack.c.h.b16 %v146
    %v854 = vunpack.c.l.b16 %v147
    %v855 = vunpack.c.h.b16 %v147
    %v856 = vunpack.c.l.b16 %v148
    %v857 = vunpack.c.h.b16 %v148
    %v858 = vunpack.c.l.b16 %v149
    %v859 = vunpack.c.h.b16 %v149
    %v860 = vunpack.c.l.b16 %v150
    %v861 = vunpack.c.h.b16 %v150
    %v862 = vunpack.c.l.b16 %v151
    %v863 = vunpack.c.h.b16 %v151
    %v864 = vunpack.c.l.b16 %v152
    %v865 = vunpack.c.h.b16 %v152
    %v866 = vunpack.c.l.b16 %v153
    %v867 = vunpack.c.h.b16 %v153
    %v868 = vunpack.c.l.b16 %v154
    %v869 = vunpack.c.h.b16 %v154
    %v870 = vunpack.c.l.b16 %v155
    %v871 = vunpack.c.h.b16 %v155
    %v872 = vunpack.c.l.b16 %v156
    %v873 = vunpack.c.h.b16 %v156
    %v874 = vunpack.c.l.b16 %v157
    %v875 = vunpack.c.h.b16 %v157
    %v876 = vunpack.c.l.b16 %v158
    %v877 = vunpack.c.h.b16 %v158
    %v878 = vunpack.c.l.b16 %v159
    %v879 = vunpack.c.h.b16 %v159
    %v880 = vunpack.c.l.b16 %v160
    %v881 = vunpack.c.h.b16 %v160
    %v882 = vunpack.c.l.b16 %v161
    %v883 = vunpack.c.h.b16 %v161
    %v884 = vunpack.c.l.b16 %v162
    %v885 = vunpack.c.h.b16 %v162
    %v886 = vunpack.c.l.b16 %v163
    %v887 = vunpack.c.h.b16 %v163
    %v888 = vunpack.c.l.b16 %v164
    %v889 = vunpack.c.h.b16 %v164
    %v890 = vunpack.c.l.b16 %v165
    %v891 = vunpack.c.h.b16 %v165
    %v892 = vunpack.c.l.b16 %v166
    %v893 = vunpack.c.h.b16 %v166
    %v894 = vunpack.c.l.b16 %v167
    %v895 = vunpack.c.h.b16 %v167
    %v896 = vunpack.c.l.b16 %v168
    %v897 = vunpack.c.h.b16 %v168
    %v898 = vunpack.c.l.b16 %v169
    %v899 = vunpack.c.h.b16 %v169
    %v900 = vunpack.c.l.b16 %v170
    %v901 = vunpack.c.h.b16 %v170
    %v902 = vunpack.c.l.b16 %v171
    %v903 = vunpack.c.h.b16 %v171
    %v904 = vunpack.c.l.b16 %v172
    %v905 = vunpack.c.h.b16 %v172
    %v906 = vunpack.c.l.b16 %v173
    %v907 = vunpack.c.h.b16 %v173
    %v908 = vunpack.c.l.b16 %v174
    %v909 = vunpack.c.h.b16 %v174
    %v910 = vunpack.c.l.b16 %v175
    %v911 = vunpack.c.h.b16 %v175
    %v912 = vunpack.c.l.b16 %v176
    %v913 = vunpack.c.h.b16 %v176
    %v914 = vunpack.c.l.b16 %v177
    %v915 = vunpack.c.h.b16 %v177
    %v916 = vunpack.c.l.b16 %v178
    %v917 = vunpack.c.h.b16 %v178
    %v918 = vunpack.c.l.b16 %v179
    %v919 = vunpack.c.h.b16 %v179
    %v920 = vunpack.c.l.b16 %v180
    %v921 = vunpack.c.h.b16 %v180
    %v922 = vunpack.c.l.b16 %v181
    %v923 = vunpack.c.h.b16 %v181
    %v924 = vunpack.c.l.b16 %v182
    %v925 = vunpack.c.h.b16 %v182
    %v926 = vunpack.c.l.b16 %v183
    %v927 = vunpack.c.h.b16 %v183
    %v928 = vunpack.c.l.b16 %v184
    %v929 = vunpack.c.h.b16 %v184
    %v930 = vunpack.c.l.b16 %v185
    %v931 = vunpack.c.h.b16 %v185
    %v932 = vunpack.c.l.b16 %v186
    %v933 = vunpack.c.h.b16 %v186
    %v934 = vunpack.c.l.b16 %v187
    %v935 = vunpack.c.h.b16 %v187
    %v936 = vunpack.c.l.b16 %v188
    %v937 = vunpack.c.h.b16 %v188
    %v938 = vunpack.c.l.b16 %v189
    %v939 = vunpack.c.h.b16 %v189
    %v940 = vunpack.c.l.b16 %v190
    %v941 = vunpack.c.h.b16 %v190
    %v942 = vunpack.c.l.b16 %v191
    %v943 = vunpack.c.h.b16 %v191
    %v944 = vunpack.c.l.b16 %v192
    %v945 = vunpack.c.h.b16 %v192
    %v946 = vunpack.c.l.b16 %v193
    %v947 = vunpack.c.h.b16 %v193
    %v948 = vunpack.c.l.b16 %v194
    %v949 = vunpack.c.h.b16 %v194
    %v950 = vunpack.c.l.b16 %v195
    %v951 = vunpack.c.h.b16 %v195
    %v952 = vunpack.c.l.b16 %v196
    %v953 = vunpack.c.h.b16 %v196
    %v954 = vunpack.c.l.b16 %v197
    %v955 = vunpack.c.h.b16 %v197
    %v956 = vunpack.c.l.b16 %v198
    %v957 = vunpack.c.h.b16 %v198
    %v958 = vunpack.c.l.b16 %v199
    %v959 = vunpack.c.h.b16 %v199
    %v960 = vunpack.c.l.b16 %v200
    %v961 = vunpack.c.h.b16 %v200
    %v962 = vunpack.c.l.b16 %v201
    %v963 = vunpack.c.h.b16 %v201
    %v964 = vunpack.c.l.b16 %v202
    %v965 = vunpack.c.h.b16 %v202
    %v966 = vunpack.c.l.b16 %v203
    %v967 = vunpack.c.h.b16 %v203
    %v968 = vunpack.c.l.b16 %v204
    %v969 = vunpack.c.h.b16 %v204
    %v970 = vunpack.c.l.b16 %v205
    %v971 = vunpack.c.h.b16 %v205
    %v972 = vunpack.c.l.b16 %v206
    %v973 = vunpack.c.h.b16 %v206
    %v974 = vunpack.c.l.b16 %v207
    %v975 = vunpack.c.h.b16 %v207
    %v976 = vunpack.c.l.b16 %v208
    %v977 = vunpack.c.h.b16 %v208
    %v978 = vunpack.c.l.b16 %v209
    %v979 = vunpack.c.h.b16 %v209
    %v980 = vunpack.c.l.b16 %v210
    %v981 = vunpack.c.h.b16 %v210
    %v982 = vunpack.c.l.b16 %v211
    %v983 = vunpack.c.h.b16 %v211
    %v984 = vunpack.c.l.b16 %v212
    %v985 = vunpack.c.h.b16 %v212
    %v986 = vunpack.c.l.b16 %v213
    %v987 = vunpack.c.h.b16 %v213
    %v988 = vunpack.c.l.b16 %v214
    %v989 = vunpack.c.h.b16 %v214
    %v990 = vunpack.c.l.b16 %v215
    %v991 = vunpack.c.h.b16 %v215
    %v992 = vunpack.c.l.b16 %v216
    %v993 = vunpack.c.h.b16 %v216
    %v994 = vunpack.c.l.b16 %v217
    %v995 = vunpack.c.h.b16 %v217
    %v996 = vunpack.c.l.b16 %v218
    %v997 = vunpack.c.h.b16 %v218
    %v998 = vunpack.c.l.b16 %v219
    %v999 = vunpack.c.h.b16 %v219
    %v1000 = vunpack.c.l.b16 %v220
    %v1001 = vunpack.c.h.b16 %v220
    %v1002 = vunpack.c.l.b16 %v221
    %v1003 = vunpack.c.h.b16 %v221
    %v1004 = vunpack.c.l.b16 %v222
    %v1005 = vunpack.c.h.b16 %v222
    %v1006 = vunpack.c.l.b16 %v223
    %v1007 = vunpack.c.h.b16 %v223
    %v1008 = vunpack.c.l.b16 %v224
    %v1009 = vunpack.c.h.b16 %v224
    %v1010 = vunpack.c.l.b16 %v225
    %v1011 = vunpack.c.h.b16 %v225
    %v1012 = vunpack.c.l.b16 %v226
    %v1013 = vunpack.c.h.b16 %v226
    %v1014 = vunpack.c.l.b16 %v227
    %v1015 = vunpack.c.h.b16 %v227
    %v1016 = vunpack.c.l.b16 %v228
    %v1017 = vunpack.c.h.b16 %v228
    %v1018 = vunpack.c.l.b16 %v229
    %v1019 = vunpack.c.h.b16 %v229
    %v1020 = vunpack.c.l.b16 %v230
    %v1021 = vunpack.c.h.b16 %v230
    %v1022 = vunpack.c.l.b16 %v231
    %v1023 = vunpack.c.h.b16 %v231
    %v1024 = vunpack.c.l.b16 %v232
    %v1025 = vunpack.c.h.b16 %v232
    %v1026 = vunpack.c.l.b16 %v233
    %v1027 = vunpack.c.h.b16 %v233
    %v1028 = vunpack.c.l.b16 %v234
    %v1029 = vunpack.c.h.b16 %v234
    %v1030 = vunpack.c.l.b16 %v235
    %v1031 = vunpack.c.h.b16 %v235
    %v1032 = vunpack.c.l.b16 %v236
    %v1033 = vunpack.c.h.b16 %v236
    %v1034 = vunpack.c.l.b16 %v237
    %v1035 = vunpack.c.h.b16 %v237
    %v1036 = vunpack.c.l.b16 %v238
    %v1037 = vunpack.c.h.b16 %v238
    %v1038 = vunpack.c.l.b16 %v239
    %v1039 = vunpack.c.h.b16 %v239
    %v1040 = vunpack.c.l.b16 %v240
    %v1041 = vunpack.c.h.b16 %v240
    %v1042 = vunpack.c.l.b16 %v241
    %v1043 = vunpack.c.h.b16 %v241
    %v1044 = vunpack.c.l.b16 %v242
    %v1045 = vunpack.c.h.b16 %v242
    %v1046 = vunpack.c.l.b16 %v243
    %v1047 = vunpack.c.h.b16 %v243
    %v1048 = vunpack.c.l.b16 %v244
    %v1049 = vunpack.c.h.b16 %v244
    %v1050 = vunpack.c.l.b16 %v245
    %v1051 = vunpack.c.h.b16 %v245
    %v1052 = vunpack.c.l.b16 %v246
    %v1053 = vunpack.c.h.b16 %v246
    %v1054 = vunpack.c.l.b16 %v247
    %v1055 = vunpack.c.h.b16 %v247
    %v1056 = vunpack.c.l.b16 %v248
    %v1057 = vunpack.c.h.b16 %v248
    %v1058 = vunpack.c.l.b16 %v249
    %v1059 = vunpack.c.h.b16 %v249
    %v1060 = vunpack.c.l.b16 %v250
    %v1061 = vunpack.c.h.b16 %v250
    %v1062 = vunpack.c.l.b16 %v251
    %v1063 = vunpack.c.h.b16 %v251
    %v1064 = vunpack.c.l.b16 %v252
    %v1065 = vunpack.c.h.b16 %v252
    %v1066 = vunpack.c.l.b16 %v253
    %v1067 = vunpack.c.h.b16 %v253
    %v1068 = vunpack.c.l.b16 %v254
    %v1069 = vunpack.c.h.b16 %v254
    %v1070 = vunpack.c.l.b16 %v255
    %v1071 = vunpack.c.h.b16 %v255
    %v1072 = vunpack.c.l.b16 %v256
    %v1073 = vunpack.c.h.b16 %v256
    %v1074 = vunpack.c.l.b16 %v257
    %v1075 = vunpack.c.h.b16 %v257
    %v1076 = vunpack.c.l.b16 %v258
    %v1077 = vunpack.c.h.b16 %v258
    %v1078 = vunpack.c.l.b16 %v259
    %v1079 = vunpack.c.h.b16 %v259
    %v1080 = vunpack.c.l.b16 %v260
    %v1081 = vunpack.c.h.b16 %v260
    %v1082 = vunpack.c.l.b16 %v261
    %v1083 = vunpack.c.h.b16 %v261
    %v1084 = vunpack.c.l.b16 %v262
    %v1085 = vunpack.c.h.b16 %v262
    %v1086 = vunpack.c.l.b16 %v263
    %v1087 = vunpack.c.h.b16 %v263
    %v1088 = vunpack.c.l.b16 %v264
    %v1089 = vunpack.c.h.b16 %v264
    %v1090 = vunpack.c.l.b16 %v265
    %v1091 = vunpack.c.h.b16 %v265
    %v1092 = vunpack.c.l.b16 %v266
    %v1093 = vunpack.c.h.b16 %v266
    %v1094 = vunpack.c.l.b16 %v267
    %v1095 = vunpack.c.h.b16 %v267
    %v1096 = vunpack.c.l.b16 %v268
    %v1097 = vunpack.c.h.b16 %v268
    %v1098 = vunpack.c.l.b16 %v269
    %v1099 = vunpack.c.h.b16 %v269
    %v1100 = vunpack.c.l.b16 %v270
    %v1101 = vunpack.c.h.b16 %v270
    %v1102 = vunpack.c.l.b16 %v271
    %v1103 = vunpack.c.h.b16 %v271
    %v1104 = vunpack.c.l.b16 %v272
    %v1105 = vunpack.c.h.b16 %v272
    %v1106 = vunpack.c.l.b16 %v273
    %v1107 = vunpack.c.h.b16 %v273
    %v1108 = vunpack.c.l.b16 %v274
    %v1109 = vunpack.c.h.b16 %v274
    %v1110 = vunpack.c.l.b16 %v275
    %v1111 = vunpack.c.h.b16 %v275
    %v1112 = vunpack.c.l.b16 %v276
    %v1113 = vunpack.c.h.b16 %v276
    %v1114 = vunpack.c.l.b16 %v277
    %v1115 = vunpack.c.h.b16 %v277
    %v1116 = vunpack.c.l.b16 %v278
    %v1117 = vunpack.c.h.b16 %v278
    %v1118 = vunpack.c.l.b16 %v279
    %v1119 = vunpack.c.h.b16 %v279
    %v1120 = vunpack.c.l.b16 %v280
    %v1121 = vunpack.c.h.b16 %v280
    %v1122 = vunpack.c.l.b16 %v281
    %v1123 = vunpack.c.h.b16 %v281
    %v1124 = vunpack.c.l.b16 %v282
    %v1125 = vunpack.c.h.b16 %v282
    %v1126 = vunpack.c.l.b16 %v283
    %v1127 = vunpack.c.h.b16 %v283
    %v1128 = vunpack.c.l.b16 %v284
    %v1129 = vunpack.c.h.b16 %v284
    %v1130 = vunpack.c.l.b16 %v285
    %v1131 = vunpack.c.h.b16 %v285
    %v1132 = vunpack.c.l.b16 %v286
    %v1133 = vunpack.c.h.b16 %v286
    %v1134 = vunpack.c.l.b16 %v287
    %v1135 = vunpack.c.h.b16 %v287
    %v1136 = vunpack.c.l.b16 %v288
    %v1137 = vunpack.c.h.b16 %v288
    %v1138 = vunpack.c.l.b16 %v289
    %v1139 = vunpack.c.h.b16 %v289
    %v1140 = vunpack.c.l.b16 %v290
    %v1141 = vunpack.c.h.b16 %v290
    %v1142 = vunpack.c.l.b16 %v291
    %v1143 = vunpack.c.h.b16 %v291
    %v1144 = vunpack.c.l.b16 %v292
    %v1145 = vunpack.c.h.b16 %v292
    %v1146 = vunpack.c.l.b16 %v293
    %v1147 = vunpack.c.h.b16 %v293
    %v1148 = vunpack.c.l.b16 %v294
    %v1149 = vunpack.c.h.b16 %v294
    %v1150 = vunpack.c.l.b16 %v295
    %v1151 = vunpack.c.h.b16 %v295
    %v1152 = vunpack.c.l.b16 %v296
    %v1153 = vunpack.c.h.b16 %v296
    %v1154 = vunpack.c.l.b16 %v297
    %v1155 = vunpack.c.h.b16 %v297
    %v1156 = vunpack.c.l.b16 %v298
    %v1157 = vunpack.c.h.b16 %v298
    %v1158 = vunpack.c.l.b16 %v299
    %v1159 = vunpack.c.h.b16 %v299
    %v1160 = vunpack.c.l.b16 %v300
    %v1161 = vunpack.c.h.b16 %v300
    %v1162 = vunpack.c.l.b16 %v301
    %v1163 = vunpack.c.h.b16 %v301
    %v1164 = vunpack.c.l.b16 %v302
    %v1165 = vunpack.c.h.b16 %v302
    %v1166 = vunpack.c.l.b16 %v303
    %v1167 = vunpack.c.h.b16 %v303
    %v1168 = vunpack.c.l.b16 %v304
    %v1169 = vunpack.c.h.b16 %v304
    %v1170 = vunpack.c.l.b16 %v305
    %v1171 = vunpack.c.h.b16 %v305
    %v1172 = vunpack.c.l.b16 %v306
    %v1173 = vunpack.c.h.b16 %v306
    %v1174 = vunpack.c.l.b16 %v307
    %v1175 = vunpack.c.h.b16 %v307
    %v1176 = vunpack.c.l.b16 %v308
    %v1177 = vunpack.c.h.b16 %v308
    %v1178 = vunpack.c.l.b16 %v309
    %v1179 = vunpack.c.h.b16 %v309
    %v1180 = vunpack.c.l.b16 %v310
    %v1181 = vunpack.c.h.b16 %v310
    %v1182 = vunpack.c.l.b16 %v311
    %v1183 = vunpack.c.h.b16 %v311
    %v1184 = vunpack.c.l.b16 %v312
    %v1185 = vunpack.c.h.b16 %v312
    %v1186 = vunpack.c.l.b16 %v313
    %v1187 = vunpack.c.h.b16 %v313
    %v1188 = vunpack.c.l.b16 %v314
    %v1189 = vunpack.c.h.b16 %v314
    %v1190 = vunpack.c.l.b16 %v315
    %v1191 = vunpack.c.h.b16 %v315
    %v1192 = vunpack.c.l.b16 %v316
    %v1193 = vunpack.c.h.b16 %v316
    %v1194 = vunpack.c.l.b16 %v317
    %v1195 = vunpack.c.h.b16 %v317
    %v1196 = vunpack.c.l.b16 %v318
    %v1197 = vunpack.c.h.b16 %v318
    %v1198 = vunpack.c.l.b16 %v319
    %v1199 = vunpack.c.h.b16 %v319
    %v1200 = vunpack.c.l.b16 %v320
    %v1201 = vunpack.c.h.b16 %v320
    %v1202 = vunpack.c.l.b16 %v321
    %v1203 = vunpack.c.h.b16 %v321
    %v1204 = vunpack.c.l.b16 %v322
    %v1205 = vunpack.c.h.b16 %v322
    %v1206 = vunpack.c.l.b16 %v323
    %v1207 = vunpack.c.h.b16 %v323
    %v1208 = vunpack.c.l.b16 %v324
    %v1209 = vunpack.c.h.b16 %v324
    %v1210 = vunpack.c.l.b16 %v325
    %v1211 = vunpack.c.h.b16 %v325
    %v1212 = vunpack.c.l.b16 %v326
    %v1213 = vunpack.c.h.b16 %v326
    %v1214 = vunpack.c.l.b16 %v327
    %v1215 = vunpack.c.h.b16 %v327
    %v1216 = vunpack.c.l.b16 %v328
    %v1217 = vunpack.c.h.b16 %v328
    %v1218 = vunpack.c.l.b16 %v329
    %v1219 = vunpack.c.h.b16 %v329
    %v1220 = vunpack.c.l.b16 %v330
    %v1221 = vunpack.c.h.b16 %v330
    %v1222 = vunpack.c.l.b16 %v331
    %v1223 = vunpack.c.h.b16 %v331
    %v1224 = vunpack.c.l.b16 %v332
    %v1225 = vunpack.c.h.b16 %v332
    %v1226 = vunpack.c.l.b16 %v333
    %v1227 = vunpack.c.h.b16 %v333
    %v1228 = vunpack.c.l.b16 %v334
    %v1229 = vunpack.c.h.b16 %v334
    %v1230 = vunpack.c.l.b16 %v335
    %v1231 = vunpack.c.h.b16 %v335
    %v1232 = vunpack.c.l.b16 %v336
    %v1233 = vunpack.c.h.b16 %v336
    %v1234 = vunpack.c.l.b16 %v337
    %v1235 = vunpack.c.h.b16 %v337
    %v1236 = vunpack.c.l.b16 %v338
    %v1237 = vunpack.c.h.b16 %v338
    %v1238 = vunpack.c.l.b16 %v339
    %v1239 = vunpack.c.h.b16 %v339
    %v1240 = vunpack.c.l.b16 %v340
    %v1241 = vunpack.c.h.b16 %v340
    %v1242 = vunpack.c.l.b16 %v341
    %v1243 = vunpack.c.h.b16 %v341
    %v1244 = vunpack.c.l.b16 %v342
    %v1245 = vunpack.c.h.b16 %v342
    %v1246 = vunpack.c.l.b16 %v343
    %v1247 = vunpack.c.h.b16 %v343
    %v1248 = vunpack.c.l.b16 %v344
    %v1249 = vunpack.c.h.b16 %v344
    %v1250 = vunpack.c.l.b16 %v345
    %v1251 = vunpack.c.h.b16 %v345
    %v1252 = vunpack.c.l.b16 %v346
    %v1253 = vunpack.c.h.b16 %v346
    %v1254 = vunpack.c.l.b16 %v347
    %v1255 = vunpack.c.h.b16 %v347
    %v1256 = vunpack.c.l.b16 %v348
    %v1257 = vunpack.c.h.b16 %v348
    %v1258 = vunpack.c.l.b16 %v349
    %v1259 = vunpack.c.h.b16 %v349
    %v1260 = vunpack.c.l.b16 %v350
    %v1261 = vunpack.c.h.b16 %v350
    %v1262 = vunpack.c.l.b16 %v351
    %v1263 = vunpack.c.h.b16 %v351
    %v1264 = vunpack.c.l.b16 %v352
    %v1265 = vunpack.c.h.b16 %v352
    %v1266 = vunpack.c.l.b16 %v353
    %v1267 = vunpack.c.h.b16 %v353
    %v1268 = vunpack.c.l.b16 %v354
    %v1269 = vunpack.c.h.b16 %v354
    %v1270 = vunpack.c.l.b16 %v355
    %v1271 = vunpack.c.h.b16 %v355
    %v1272 = vunpack.c.l.b16 %v356
    %v1273 = vunpack.c.h.b16 %v356
    %v1274 = vunpack.c.l.b16 %v357
    %v1275 = vunpack.c.h.b16 %v357
    %v1276 = vunpack.c.l.b16 %v358
    %v1277 = vunpack.c.h.b16 %v358
    %v1278 = vunpack.c.l.b16 %v359
    %v1279 = vunpack.c.h.b16 %v359
    %v1280 = vunpack.c.l.b16 %v360
    %v1281 = vunpack.c.h.b16 %v360
    %v1282 = vunpack.c.l.b16 %v361
    %v1283 = vunpack.c.h.b16 %v361
    %v1284 = vunpack.c.l.b16 %v362
    %v1285 = vunpack.c.h.b16 %v362
    %v1286 = vpack.c.b16 %v718, %v710
    %v1287 = vpack.c.b16 %v719, %v711
    %v1288 = vpack.c.b16 %v720, %v712
    %v1289 = vpack.c.b16 %v721, %v713
    %v1290 = vpack.c.b16 %v722, %v714
    %v1291 = vpack.c.b16 %v723, %v715
    %v1292 = vpack.c.b16 %v724, %v716
    %v1293 = vpack.c.b16 %v725, %v717
    %v1294 = vpack.c.b16 %v734, %v726
    %v1295 = vpack.c.b16 %v735, %v727
    %v1296 = vpack.c.b16 %v736, %v728
    %v1297 = vpack.c.b16 %v737, %v729
    %v1298 = vpack.c.b16 %v738, %v730
    %v1299 = vpack.c.b16 %v739, %v731
    %v1300 = vpack.c.b16 %v740, %v732
    %v1301 = vpack.c.b16 %v741, %v733
    %v1302 = vpack.c.b16 %v750, %v742
    %v1303 = vpack.c.b16 %v751, %v743
    %v1304 = vpack.c.b16 %v752, %v744
    %v1305 = vpack.c.b16 %v753, %v745
    %v1306 = vpack.c.b16 %v754, %v746
    %v1307 = vpack.c.b16 %v755, %v747
    %v1308 = vpack.c.b16 %v756, %v748
    %v1309 = vpack.c.b16 %v757, %v749
    %v1310 = vpack.c.b16 %v766, %v758
    %v1311 = vpack.c.b16 %v767, %v759
    %v1312 = vpack.c.b16 %v768, %v760
    %v1313 = vpack.c.b16 %v769, %v761
    %v1314 = vpack.c.b16 %v770, %v762
    %v1315 = vpack.c.b16 %v771, %v763
    %v1316 = vpack.c.b16 %v772, %v764
    %v1317 = vpack.c.b16 %v773, %v765
    %v1318 = vpack.c.b16 %v782, %v774
    %v1319 = vpack.c.b16 %v783, %v775
    %v1320 = vpack.c.b16 %v784, %v776
    %v1321 = vpack.c.b16 %v785, %v777
    %v1322 = vpack.c.b16 %v786, %v778
    %v1323 = vpack.c.b16 %v787, %v779
    %v1324 = vpack.c.b16 %v788, %v780
    %v1325 = vpack.c.b16 %v789, %v781
    %v1326 = vpack.c.b16 %v798, %v790
    %v1327 = vpack.c.b16 %v799, %v791
    %v1328 = vpack.c.b16 %v800, %v792
    %v1329 = vpack.c.b16 %v801, %v793
    %v1330 = vpack.c.b16 %v802, %v794
    %v1331 = vpack.c.b16 %v803, %v795
    %v1332 = vpack.c.b16 %v804, %v796
    %v1333 = vpack.c.b16 %v805, %v797
    %v1334 = vpack.c.b16 %v814, %v806
    %v1335 = vpack.c.b16 %v815, %v807
    %v1336 = vpack.c.b16 %v816, %v808
    %v1337 = vpack.c.b16 %v817, %v809
    %v1338 = vpack.c.b16 %v818, %v810
    %v1339 = vpack.c.b16 %v819, %v811
    %v1340 = vpack.c.b16 %v820, %v812
    %v1341 = vpack.c.b16 %v821, %v813
    %v1342 = vpack.c.b16 %v830, %v822
    %v1343 = vpack.c.b16 %v831, %v823
    %v1344 = vpack.c.b16 %v832, %v824
    %v1345 = vpack.c.b16 %v833, %v825
    %v1346 = vpack.c.b16 %v834, %v826
    %v1347 = vpack.c.b16 %v835, %v827
    %v1348 = vpack.c.b16 %v836, %v828
    %v1349 = vpack.c.b16 %v837, %v829
    %v1350 = vpack.c.b16 %v846, %v838
    %v1351 = vpack.c.b16 %v847, %v839
    %v1352 = vpack.c.b16 %v848, %v840
    %v1353 = vpack.c.b16 %v849, %v841
    %v1354 = vpack.c.b16 %v850, %v842
    %v1355 = vpack.c.b16 %v851, %v843
    %v1356 = vpack.c.b16 %v852, %v844
    %v1357 = vpack.c.b16 %v853, %v845
    %v1358 = vpack.c.b16 %v862, %v854
    %v1359 = vpack.c.b16 %v863, %v855
    %v1360 = vpack.c.b16 %v864, %v856
    %v1361 = vpack.c.b16 %v865, %v857
    %v1362 = vpack.c.b16 %v866, %v858
    %v1363 = vpack.c.b16 %v867, %v859
    %v1364 = vpack.c.b16 %v868, %v860
    %v1365 = vpack.c.b16 %v869, %v861
    %v1366 = vpack.c.b16 %v878, %v870
    %v1367 = vpack.c.b16 %v879, %v871
    %v1368 = vpack.c.b16 %v880, %v872
    %v1369 = vpack.c.b16 %v881, %v873
    %v1370 = vpack.c.b16 %v882, %v874
    %v1371 = vpack.c.b16 %v883, %v875
    %v1372 = vpack.c.b16 %v884, %v876
    %v1373 = vpack.c.b16 %v885, %v877
    %v1374 = vpack.c.b16 %v894, %v886
    %v1375 = vpack.c.b16 %v895, %v887
    %v1376 = vpack.c.b16 %v896, %v888
    %v1377 = vpack.c.b16 %v897, %v889
    %v1378 = vpack.c.b16 %v898, %v890
    %v1379 = vpack.c.b16 %v899, %v891
    %v1380 = vpack.c.b16 %v900, %v892
    %v1381 = vpack.c.b16 %v901, %v893
    %v1382 = vpack.c.b16 %v910, %v902
    %v1383 = vpack.c.b16 %v911, %v903
    %v1384 = vpack.c.b16 %v912, %v904
    %v1385 = vpack.c.b16 %v913, %v905
    %v1386 = vpack.c.b16 %v914, %v906
    %v1387 = vpack.c.b16 %v915, %v907
    %v1388 = vpack.c.b16 %v916, %v908
    %v1389 = vpack.c.b16 %v917, %v909
    %v1390 = vpack.c.b16 %v926, %v918
    %v1391 = vpack.c.b16 %v927, %v919
    %v1392 = vpack.c.b16 %v928, %v920
    %v1393 = vpack.c.b16 %v929, %v921
    %v1394 = vpack.c.b16 %v930, %v922
    %v1395 = vpack.c.b16 %v931, %v923
    %v1396 = vpack.c.b16 %v932, %v924
    %v1397 = vpack.c.b16 %v933, %v925
    %v1398 = vpack.c.b16 %v942, %v934
    %v1399 = vpack.c.b16 %v943, %v935
    %v1400 = vpack.c.b16 %v944, %v936
    %v1401 = vpack.c.b16 %v945, %v937
    %v1402 = vpack.c.b16 %v946, %v938
    %v1403 = vpack.c.b16 %v947, %v939
    %v1404 = vpack.c.b16 %v948, %v940
    %v1405 = vpack.c.b16 %v949, %v941
    %v1406 = vpack.c.b16 %v958, %v950
    %v1407 = vpack.c.b16 %v959, %v951
    %v1408 = vpack.c.b16 %v960, %v952
    %v1409 = vpack.c.b16 %v961, %v953
    %v1410 = vpack.c.b16 %v962, %v954
    %v1411 = vpack.c.b16 %v963, %v955
    %v1412 = vpack.c.b16 %v964, %v956
    %v1413 = vpack.c.b16 %v965, %v957
    %v1414 = vpack.c.b16 %v974, %v966
    %v1415 = vpack.c.b16 %v975, %v967
    %v1416 = vpack.c.b16 %v976, %v968
    %v1417 = vpack.c.b16 %v977, %v969
    %v1418 = vpack.c.b16 %v978, %v970
    %v1419 = vpack.c.b16 %v979, %v971
    %v1420 = vpack.c.b16 %v980, %v972
    %v1421 = vpack.c.b16 %v981, %v973
    %v1422 = vpack.c.b16 %v990, %v982
    %v1423 = vpack.c.b16 %v991, %v983
    %v1424 = vpack.c.b16 %v992, %v984
    %v1425 = vpack.c.b16 %v993, %v985
    %v1426 = vpack.c.b16 %v994, %v986
    %v1427 = vpack.c.b16 %v995, %v987
    %v1428 = vpack.c.b16 %v996, %v988
    %v1429 = vpack.c.b16 %v997, %v989
    %v1430 = vpack.c.b16 %v1006, %v998
    %v1431 = vpack.c.b16 %v1007, %v999
    %v1432 = vpack.c.b16 %v1008, %v1000
    %v1433 = vpack.c.b16 %v1009, %v1001
    %v1434 = vpack.c.b16 %v1010, %v1002
    %v1435 = vpack.c.b16 %v1011, %v1003
    %v1436 = vpack.c.b16 %v1012, %v1004
    %v1437 = vpack.c.b16 %v1013, %v1005
    %v1438 = vpack.c.b16 %v1022, %v1014
    %v1439 = vpack.c.b16 %v1023, %v1015
    %v1440 = vpack.c.b16 %v1024, %v1016
    %v1441 = vpack.c.b16 %v1025, %v1017
    %v1442 = vpack.c.b16 %v1026, %v1018
    %v1443 = vpack.c.b16 %v1027, %v1019
    %v1444 = vpack.c.b16 %v1028, %v1020
    %v1445 = vpack.c.b16 %v1029, %v1021
    %v1446 = vpack.c.b16 %v1038, %v1030
    %v1447 = vpack.c.b16 %v1039, %v1031
    %v1448 = vpack.c.b16 %v1040, %v1032
    %v1449 = vpack.c.b16 %v1041, %v1033
    %v1450 = vpack.c.b16 %v1042, %v1034
    %v1451 = vpack.c.b16 %v1043, %v1035
    %v1452 = vpack.c.b16 %v1044, %v1036
    %v1453 = vpack.c.b16 %v1045, %v1037
    %v1454 = vpack.c.b16 %v1054, %v1046
    %v1455 = vpack.c.b16 %v1055, %v1047
    %v1456 = vpack.c.b16 %v1056, %v1048
    %v1457 = vpack.c.b16 %v1057, %v1049
    %v1458 = vpack.c.b16 %v1058, %v1050
    %v1459 = vpack.c.b16 %v1059, %v1051
    %v1460 = vpack.c.b16 %v1060, %v1052
    %v1461 = vpack.c.b16 %v1061, %v1053
    %v1462 = vpack.c.b16 %v1070, %v1062
    %v1463 = vpack.c.b16 %v1071, %v1063
    %v1464 = vpack.c.b16 %v1072, %v1064
    %v1465 = vpack.c.b16 %v1073, %v1065
    %v1466 = vpack.c.b16 %v1074, %v1066
    %v1467 = vpack.c.b16 %v1075, %v1067
    %v1468 = vpack.c.b16 %v1076, %v1068
    %v1469 = vpack.c.b16 %v1077, %v1069
    %v1470 = vpack.c.b16 %v1086, %v1078
    %v1471 = vpack.c.b16 %v1087, %v1079
    %v1472 = vpack.c.b16 %v1088, %v1080
    %v1473 = vpack.c.b16 %v1089, %v1081
    %v1474 = vpack.c.b16 %v1090, %v1082
    %v1475 = vpack.c.b16 %v1091, %v1083
    %v1476 = vpack.c.b16 %v1092, %v1084
    %v1477 = vpack.c.b16 %v1093, %v1085
    %v1478 = vpack.c.b16 %v1102, %v1094
    %v1479 = vpack.c.b16 %v1103, %v1095
    %v1480 = vpack.c.b16 %v1104, %v1096
    %v1481 = vpack.c.b16 %v1105, %v1097
    %v1482 = vpack.c.b16 %v1106, %v1098
    %v1483 = vpack.c.b16 %v1107, %v1099
    %v1484 = vpack.c.b16 %v1108, %v1100
    %v1485 = vpack.c.b16 %v1109, %v1101
    %v1486 = vpack.c.b16 %v1118, %v1110
    %v1487 = vpack.c.b16 %v1119, %v1111
    %v1488 = vpack.c.b16 %v1120, %v1112
    %v1489 = vpack.c.b16 %v1121, %v1113
    %v1490 = vpack.c.b16 %v1122, %v1114
    %v1491 = vpack.c.b16 %v1123, %v1115
    %v1492 = vpack.c.b16 %v1124, %v1116
    %v1493 = vpack.c.b16 %v1125, %v1117
    %v1494 = vpack.c.b16 %v1134, %v1126
    %v1495 = vpack.c.b16 %v1135, %v1127
    %v1496 = vpack.c.b16 %v1136, %v1128
    %v1497 = vpack.c.b16 %v1137, %v1129
    %v1498 = vpack.c.b16 %v1138, %v1130
    %v1499 = vpack.c.b16 %v1139, %v1131
    %v1500 = vpack.c.b16 %v1140, %v1132
    %v1501 = vpack.c.b16 %v1141, %v1133
    %v1502 = vpack.c.b16 %v1150, %v1142
    %v1503 = vpack.c.b16 %v1151, %v1143
    %v1504 = vpack.c.b16 %v1152, %v1144
    %v1505 = vpack.c.b16 %v1153, %v1145
    %v1506 = vpack.c.b16 %v1154, %v1146
    %v1507 = vpack.c.b16 %v1155, %v1147
    %v1508 = vpack.c.b16 %v1156, %v1148
    %v1509 = vpack.c.b16 %v1157, %v1149
    %v1510 = vpack.c.b16 %v1166, %v1158
    %v1511 = vpack.c.b16 %v1167, %v1159
    %v1512 = vpack.c.b16 %v1168, %v1160
    %v1513 = vpack.c.b16 %v1169, %v1161
    %v1514 = vpack.c.b16 %v1170, %v1162
    %v1515 = vpack.c.b16 %v1171, %v1163
    %v1516 = vpack.c.b16 %v1172, %v1164
    %v1517 = vpack.c.b16 %v1173, %v1165
    %v1518 = vpack.c.b16 %v1182, %v1174
    %v1519 = vpack.c.b16 %v1183, %v1175
    %v1520 = vpack.c.b16 %v1184, %v1176
    %v1521 = vpack.c.b16 %v1185, %v1177
    %v1522 = vpack.c.b16 %v1186, %v1178
    %v1523 = vpack.c.b16 %v1187, %v1179
    %v1524 = vpack.c.b16 %v1188, %v1180
    %v1525 = vpack.c.b16 %v1189, %v1181
    %v1526 = vpack.c.b16 %v1198, %v1190
    %v1527 = vpack.c.b16 %v1199, %v1191
    %v1528 = vpack.c.b16 %v1200, %v1192
    %v1529 = vpack.c.b16 %v1201, %v1193
    %v1530 = vpack.c.b16 %v1202, %v1194
    %v1531 = vpack.c.b16 %v1203, %v1195
    %v1532 = vpack.c.b16 %v1204, %v1196
    %v1533 = vpack.c.b16 %v1205, %v1197
    %v1534 = vpack.c.b16 %v1214, %v1206
    %v1535 = vpack.c.b16 %v1215, %v1207
    %v1536 = vpack.c.b16 %v1216, %v1208
    %v1537 = vpack.c.b16 %v1217, %v1209
    %v1538 = vpack.c.b16 %v1218, %v1210
    %v1539 = vpack.c.b16 %v1219, %v1211
    %v1540 = vpack.c.b16 %v1220, %v1212
    %v1541 = vpack.c.b16 %v1221, %v1213
    %v1542 = vpack.c.b16 %v1230, %v1222
    %v1543 = vpack.c.b16 %v1231, %v1223
    %v1544 = vpack.c.b16 %v1232, %v1224
    %v1545 = vpack.c.b16 %v1233, %v1225
    %v1546 = vpack.c.b16 %v1234, %v1226
    %v1547 = vpack.c.b16 %v1235, %v1227
    %v1548 = vpack.c.b16 %v1236, %v1228
    %v1549 = vpack.c.b16 %v1237, %v1229
    %v1550 = vpack.c.b16 %v1246, %v1238
    %v1551 = vpack.c.b16 %v1247, %v1239
    %v1552 = vpack.c.b16 %v1248, %v1240
    %v1553 = vpack.c.b16 %v1249, %v1241
    %v1554 = vpack.c.b16 %v1250, %v1242
    %v1555 = vpack.c.b16 %v1251, %v1243
    %v1556 = vpack.c.b16 %v1252, %v1244
    %v1557 = vpack.c.b16 %v1253, %v1245
    %v1558 = vpack.c.b16 %v1262, %v1254
    %v1559 = vpack.c.b16 %v1263, %v1255
    %v1560 = vpack.c.b16 %v1264, %v1256
    %v1561 = vpack.c.b16 %v1265, %v1257
    %v1562 = vpack.c.b16 %v1266, %v1258
    %v1563 = vpack.c.b16 %v1267, %v1259
    %v1564 = vpack.c.b16 %v1268, %v1260
    %v1565 = vpack.c.b16 %v1269, %v1261
    %v1566 = vpack.c.b16 %v1278, %v1270
    %v1567 = vpack.c.b16 %v1279, %v1271
    %v1568 = vpack.c.b16 %v1280, %v1272
    %v1569 = vpack.c.b16 %v1281, %v1273
    %v1570 = vpack.c.b16 %v1282, %v1274
    %v1571 = vpack.c.b16 %v1283, %v1275
    %v1572 = vpack.c.b16 %v1284, %v1276
    %v1573 = vpack.c.b16 %v1285, %v1277
    %vm1862 = vcmask 523264
    %v1864 = vsel %vm1862, %v417, 0
    %1866 = vmatprep.subr.bf16.mxu0 %v1343
    %1867 = vmatpush1.bf16.msra.mxu0 %v1342
    %1868 = vmatprep.subr.bf16.mxu0 %v1335
    %1869 = vmatpush1.bf16.msra.mxu0 %v1334
    %1870 = vmatprep.subr.bf16.mxu0 %v1327
    %1871 = vmatpush1.bf16.msra.mxu0 %v1326
    %1872 = vmatprep.subr.bf16.mxu0 %v1319
    %1873 = vmatpush1.bf16.msra.mxu0 %v1318
    %1874 = vmatprep.subr.bf16.mxu0 %v1311
    %1875 = vmatpush1.bf16.msra.mxu0 %v1310
    %1876 = vmatprep.subr.bf16.mxu0 %v1303
    %1877 = vmatpush1.bf16.msra.mxu0 %v1302
    %1878 = vmatprep.subr.bf16.mxu0 %v1295
    %1879 = vmatpush1.bf16.msra.mxu0 %v1294
    %1880 = vmatprep.subr.bf16.mxu0 %v1287
    %1881 = vmatpush1.bf16.msra.mxu0 %v1286
    %1882 = vmatprep.subr.bf16.mxu0 %v1407
    %1883 = vmatpush2.bf16.msra.mxu0 %v1406
    %1884 = vmatprep.subr.bf16.mxu0 %v1399
    %1885 = vmatpush2.bf16.msra.mxu0 %v1398
    %1886 = vmatprep.subr.bf16.mxu0 %v1391
    %1887 = vmatpush2.bf16.msra.mxu0 %v1390
    %1888 = vmatprep.subr.bf16.mxu0 %v1383
    %1889 = vmatpush2.bf16.msra.mxu0 %v1382
    %1890 = vmatprep.subr.bf16.mxu0 %v1375
    %1891 = vmatpush2.bf16.msra.mxu0 %v1374
    %1892 = vmatprep.subr.bf16.mxu0 %v1367
    %1893 = vmatpush2.bf16.msra.mxu0 %v1366
    %1894 = vmatprep.subr.bf16.mxu0 %v1359
    %1895 = vmatpush2.bf16.msra.mxu0 %v1358
    %1896 = vmatprep.subr.bf16.mxu0 %v1351
    %1897 = vmatpush2.bf16.msra.mxu0 %v1350
    %1898 = vmatprep.mubr.bf16.mxu0 %v414
    %1899 = vmatmul.mubr.bf16.gmra.mxu0 %v413
    %v1900 = vpop.f32.mrf.mxu0
    %v1901 = vadd.f32 %v368, %v1900
    %v1902 = vpop.f32.mrf.mxu0
    %v1903 = vadd.f32 %v372, %v1902
    %v1904 = vpop.f32.mrf.mxu0
    %v1905 = vpop.f32.mrf.mxu0
    %1906 = vdwg.mxu0
    %1907 = vmatprep.subr.bf16.mxu0 %v1471
    %1908 = vmatpush1.bf16.msra.mxu0 %v1470
    %1909 = vmatprep.subr.bf16.mxu0 %v1463
    %1910 = vmatpush1.bf16.msra.mxu0 %v1462
    %1911 = vmatprep.subr.bf16.mxu0 %v1455
    %1912 = vmatpush1.bf16.msra.mxu0 %v1454
    %1913 = vmatprep.subr.bf16.mxu0 %v1447
    %1914 = vmatpush1.bf16.msra.mxu0 %v1446
    %1915 = vmatprep.subr.bf16.mxu0 %v1439
    %1916 = vmatpush1.bf16.msra.mxu0 %v1438
    %1917 = vmatprep.subr.bf16.mxu0 %v1431
    %1918 = vmatpush1.bf16.msra.mxu0 %v1430
    %1919 = vmatprep.subr.bf16.mxu0 %v1423
    %1920 = vmatpush1.bf16.msra.mxu0 %v1422
    %1921 = vmatprep.subr.bf16.mxu0 %v1415
    %1922 = vmatpush1.bf16.msra.mxu0 %v1414
    %1923 = vmatprep.subr.bf16.mxu0 %v1535
    %1924 = vmatpush2.bf16.msra.mxu0 %v1534
    %1925 = vmatprep.subr.bf16.mxu0 %v1527
    %1926 = vmatpush2.bf16.msra.mxu0 %v1526
    %1927 = vmatprep.subr.bf16.mxu0 %v1519
    %1928 = vmatpush2.bf16.msra.mxu0 %v1518
    %1929 = vmatprep.subr.bf16.mxu0 %v1511
    %1930 = vmatpush2.bf16.msra.mxu0 %v1510
    %1931 = vmatprep.subr.bf16.mxu0 %v1503
    %1932 = vmatpush2.bf16.msra.mxu0 %v1502
    %1933 = vmatprep.subr.bf16.mxu0 %v1495
    %1934 = vmatpush2.bf16.msra.mxu0 %v1494
    %1935 = vmatprep.subr.bf16.mxu0 %v1487
    %1936 = vmatpush2.bf16.msra.mxu0 %v1486
    %1937 = vmatprep.subr.bf16.mxu0 %v1479
    %1938 = vmatpush2.bf16.msra.mxu0 %v1478
    %1939 = vmatprep.mubr.bf16.mxu0 %v416
    %1940 = vmatmul.mubr.bf16.gmra.mxu0 %v415
    %v1941 = vpop.f32.mrf.mxu0
    %v1942 = vadd.f32 %v1901, %v1941
    %v1943 = vpop.f32.mrf.mxu0
    %v1944 = vadd.f32 %v1903, %v1943
    %v1945 = vpop.f32.mrf.mxu0
    %v1946 = vpop.f32.mrf.mxu0
    %1947 = vdwg.mxu0
    %1948 = vmatprep.subr.bf16.mxu0 0
    %1949 = vmatpush1.bf16.msra.mxu0 0
    %1950 = vmatprep.subr.bf16.mxu0 0
    %1951 = vmatpush1.bf16.msra.mxu0 0
    %1952 = vmatprep.subr.bf16.mxu0 0
    %1953 = vmatpush1.bf16.msra.mxu0 0
    %1954 = vmatprep.subr.bf16.mxu0 0
    %1955 = vmatpush1.bf16.msra.mxu0 0
    %1956 = vmatprep.subr.bf16.mxu0 %v1567
    %1957 = vmatpush1.bf16.msra.mxu0 %v1566
    %1958 = vmatprep.subr.bf16.mxu0 %v1559
    %1959 = vmatpush1.bf16.msra.mxu0 %v1558
    %1960 = vmatprep.subr.bf16.mxu0 %v1551
    %1961 = vmatpush1.bf16.msra.mxu0 %v1550
    %1962 = vmatprep.subr.bf16.mxu0 %v1543
    %1963 = vmatpush1.bf16.msra.mxu0 %v1542
    %1964 = vmatprep.subr.bf16.mxu0 0
    %1965 = vmatpush2.bf16.msra.mxu0 0
    %1966 = vmatprep.subr.bf16.mxu0 0
    %1967 = vmatpush2.bf16.msra.mxu0 0
    %1968 = vmatprep.subr.bf16.mxu0 0
    %1969 = vmatpush2.bf16.msra.mxu0 0
    %1970 = vmatprep.subr.bf16.mxu0 0
    %1971 = vmatpush2.bf16.msra.mxu0 0
    %1972 = vmatprep.subr.bf16.mxu0 0
    %1973 = vmatpush2.bf16.msra.mxu0 0
    %1974 = vmatprep.subr.bf16.mxu0 0
    %1975 = vmatpush2.bf16.msra.mxu0 0
    %1976 = vmatprep.subr.bf16.mxu0 0
    %1977 = vmatpush2.bf16.msra.mxu0 0
    %1978 = vmatprep.subr.bf16.mxu0 0
    %1979 = vmatpush2.bf16.msra.mxu0 0
    %1980 = vmatprep.mubr.bf16.mxu0 0
    %1981 = vmatmul.mubr.bf16.gmra.mxu0 %v1864
    %v1982 = vpop.f32.mrf.mxu0
    %v1983 = vadd.f32 %v1942, %v1982
    %v1984 = vpop.f32.mrf.mxu0
    %v1985 = vadd.f32 %v1944, %v1984
    %v1986 = vpop.f32.mrf.mxu0
    %v1987 = vpop.f32.mrf.mxu0
    %1988 = vdwg.mxu0
    %1989 = vmatprep.subr.bf16.mxu0 %v1345
    %1990 = vmatpush1.bf16.msra.mxu0 %v1344
    %1991 = vmatprep.subr.bf16.mxu0 %v1337
    %1992 = vmatpush1.bf16.msra.mxu0 %v1336
    %1993 = vmatprep.subr.bf16.mxu0 %v1329
    %1994 = vmatpush1.bf16.msra.mxu0 %v1328
    %1995 = vmatprep.subr.bf16.mxu0 %v1321
    %1996 = vmatpush1.bf16.msra.mxu0 %v1320
    %1997 = vmatprep.subr.bf16.mxu0 %v1313
    %1998 = vmatpush1.bf16.msra.mxu0 %v1312
    %1999 = vmatprep.subr.bf16.mxu0 %v1305
    %2000 = vmatpush1.bf16.msra.mxu0 %v1304
    %2001 = vmatprep.subr.bf16.mxu0 %v1297
    %2002 = vmatpush1.bf16.msra.mxu0 %v1296
    %2003 = vmatprep.subr.bf16.mxu0 %v1289
    %2004 = vmatpush1.bf16.msra.mxu0 %v1288
    %2005 = vmatprep.subr.bf16.mxu0 %v1409
    %2006 = vmatpush2.bf16.msra.mxu0 %v1408
    %2007 = vmatprep.subr.bf16.mxu0 %v1401
    %2008 = vmatpush2.bf16.msra.mxu0 %v1400
    %2009 = vmatprep.subr.bf16.mxu0 %v1393
    %2010 = vmatpush2.bf16.msra.mxu0 %v1392
    %2011 = vmatprep.subr.bf16.mxu0 %v1385
    %2012 = vmatpush2.bf16.msra.mxu0 %v1384
    %2013 = vmatprep.subr.bf16.mxu0 %v1377
    %2014 = vmatpush2.bf16.msra.mxu0 %v1376
    %2015 = vmatprep.subr.bf16.mxu0 %v1369
    %2016 = vmatpush2.bf16.msra.mxu0 %v1368
    %2017 = vmatprep.subr.bf16.mxu0 %v1361
    %2018 = vmatpush2.bf16.msra.mxu0 %v1360
    %2019 = vmatprep.subr.bf16.mxu0 %v1353
    %2020 = vmatpush2.bf16.msra.mxu0 %v1352
    %2021 = vmatprep.mubr.bf16.mxu0 %v414
    %2022 = vmatmul.mubr.bf16.gmra.mxu0 %v413
    %v2023 = vpop.f32.mrf.mxu0
    %v2024 = vadd.f32 %v376, %v2023
    %v2025 = vpop.f32.mrf.mxu0
    %v2026 = vadd.f32 %v380, %v2025
    %v2027 = vpop.f32.mrf.mxu0
    %v2028 = vpop.f32.mrf.mxu0
    %2029 = vdwg.mxu0
    %2030 = vmatprep.subr.bf16.mxu0 %v1473
    %2031 = vmatpush1.bf16.msra.mxu0 %v1472
    %2032 = vmatprep.subr.bf16.mxu0 %v1465
    %2033 = vmatpush1.bf16.msra.mxu0 %v1464
    %2034 = vmatprep.subr.bf16.mxu0 %v1457
    %2035 = vmatpush1.bf16.msra.mxu0 %v1456
    %2036 = vmatprep.subr.bf16.mxu0 %v1449
    %2037 = vmatpush1.bf16.msra.mxu0 %v1448
    %2038 = vmatprep.subr.bf16.mxu0 %v1441
    %2039 = vmatpush1.bf16.msra.mxu0 %v1440
    %2040 = vmatprep.subr.bf16.mxu0 %v1433
    %2041 = vmatpush1.bf16.msra.mxu0 %v1432
    %2042 = vmatprep.subr.bf16.mxu0 %v1425
    %2043 = vmatpush1.bf16.msra.mxu0 %v1424
    %2044 = vmatprep.subr.bf16.mxu0 %v1417
    %2045 = vmatpush1.bf16.msra.mxu0 %v1416
    %2046 = vmatprep.subr.bf16.mxu0 %v1537
    %2047 = vmatpush2.bf16.msra.mxu0 %v1536
    %2048 = vmatprep.subr.bf16.mxu0 %v1529
    %2049 = vmatpush2.bf16.msra.mxu0 %v1528
    %2050 = vmatprep.subr.bf16.mxu0 %v1521
    %2051 = vmatpush2.bf16.msra.mxu0 %v1520
    %2052 = vmatprep.subr.bf16.mxu0 %v1513
    %2053 = vmatpush2.bf16.msra.mxu0 %v1512
    %2054 = vmatprep.subr.bf16.mxu0 %v1505
    %2055 = vmatpush2.bf16.msra.mxu0 %v1504
    %2056 = vmatprep.subr.bf16.mxu0 %v1497
    %2057 = vmatpush2.bf16.msra.mxu0 %v1496
    %2058 = vmatprep.subr.bf16.mxu0 %v1489
    %2059 = vmatpush2.bf16.msra.mxu0 %v1488
    %2060 = vmatprep.subr.bf16.mxu0 %v1481
    %2061 = vmatpush2.bf16.msra.mxu0 %v1480
    %2062 = vmatprep.mubr.bf16.mxu0 %v416
    %2063 = vmatmul.mubr.bf16.gmra.mxu0 %v415
    %v2064 = vpop.f32.mrf.mxu0
    %v2065 = vadd.f32 %v2024, %v2064
    %v2066 = vpop.f32.mrf.mxu0
    %v2067 = vadd.f32 %v2026, %v2066
    %v2068 = vpop.f32.mrf.mxu0
    %v2069 = vpop.f32.mrf.mxu0
    %2070 = vdwg.mxu0
    %2071 = vmatprep.subr.bf16.mxu0 0
    %2072 = vmatpush1.bf16.msra.mxu0 0
    %2073 = vmatprep.subr.bf16.mxu0 0
    %2074 = vmatpush1.bf16.msra.mxu0 0
    %2075 = vmatprep.subr.bf16.mxu0 0
    %2076 = vmatpush1.bf16.msra.mxu0 0
    %2077 = vmatprep.subr.bf16.mxu0 0
    %2078 = vmatpush1.bf16.msra.mxu0 0
    %2079 = vmatprep.subr.bf16.mxu0 %v1569
    %2080 = vmatpush1.bf16.msra.mxu0 %v1568
    %2081 = vmatprep.subr.bf16.mxu0 %v1561
    %2082 = vmatpush1.bf16.msra.mxu0 %v1560
    %2083 = vmatprep.subr.bf16.mxu0 %v1553
    %2084 = vmatpush1.bf16.msra.mxu0 %v1552
    %2085 = vmatprep.subr.bf16.mxu0 %v1545
    %2086 = vmatpush1.bf16.msra.mxu0 %v1544
    %2087 = vmatprep.subr.bf16.mxu0 0
    %2088 = vmatpush2.bf16.msra.mxu0 0
    %2089 = vmatprep.subr.bf16.mxu0 0
    %2090 = vmatpush2.bf16.msra.mxu0 0
    %2091 = vmatprep.subr.bf16.mxu0 0
    %2092 = vmatpush2.bf16.msra.mxu0 0
    %2093 = vmatprep.subr.bf16.mxu0 0
    %2094 = vmatpush2.bf16.msra.mxu0 0
    %2095 = vmatprep.subr.bf16.mxu0 0
    %2096 = vmatpush2.bf16.msra.mxu0 0
    %2097 = vmatprep.subr.bf16.mxu0 0
    %2098 = vmatpush2.bf16.msra.mxu0 0
    %2099 = vmatprep.subr.bf16.mxu0 0
    %2100 = vmatpush2.bf16.msra.mxu0 0
    %2101 = vmatprep.subr.bf16.mxu0 0
    %2102 = vmatpush2.bf16.msra.mxu0 0
    %2103 = vmatprep.mubr.bf16.mxu0 0
    %2104 = vmatmul.mubr.bf16.gmra.mxu0 %v1864
    %v2105 = vpop.f32.mrf.mxu0
    %v2106 = vadd.f32 %v2065, %v2105
    %v2107 = vpop.f32.mrf.mxu0
    %v2108 = vadd.f32 %v2067, %v2107
    %v2109 = vpop.f32.mrf.mxu0
    %v2110 = vpop.f32.mrf.mxu0
    %2111 = vdwg.mxu0
    %2112 = vmatprep.subr.bf16.mxu0 %v1347
    %2113 = vmatpush1.bf16.msra.mxu0 %v1346
    %2114 = vmatprep.subr.bf16.mxu0 %v1339
    %2115 = vmatpush1.bf16.msra.mxu0 %v1338
    %2116 = vmatprep.subr.bf16.mxu0 %v1331
    %2117 = vmatpush1.bf16.msra.mxu0 %v1330
    %2118 = vmatprep.subr.bf16.mxu0 %v1323
    %2119 = vmatpush1.bf16.msra.mxu0 %v1322
    %2120 = vmatprep.subr.bf16.mxu0 %v1315
    %2121 = vmatpush1.bf16.msra.mxu0 %v1314
    %2122 = vmatprep.subr.bf16.mxu0 %v1307
    %2123 = vmatpush1.bf16.msra.mxu0 %v1306
    %2124 = vmatprep.subr.bf16.mxu0 %v1299
    %2125 = vmatpush1.bf16.msra.mxu0 %v1298
    %2126 = vmatprep.subr.bf16.mxu0 %v1291
    %2127 = vmatpush1.bf16.msra.mxu0 %v1290
    %2128 = vmatprep.subr.bf16.mxu0 %v1411
    %2129 = vmatpush2.bf16.msra.mxu0 %v1410
    %2130 = vmatprep.subr.bf16.mxu0 %v1403
    %2131 = vmatpush2.bf16.msra.mxu0 %v1402
    %2132 = vmatprep.subr.bf16.mxu0 %v1395
    %2133 = vmatpush2.bf16.msra.mxu0 %v1394
    %2134 = vmatprep.subr.bf16.mxu0 %v1387
    %2135 = vmatpush2.bf16.msra.mxu0 %v1386
    %2136 = vmatprep.subr.bf16.mxu0 %v1379
    %2137 = vmatpush2.bf16.msra.mxu0 %v1378
    %2138 = vmatprep.subr.bf16.mxu0 %v1371
    %2139 = vmatpush2.bf16.msra.mxu0 %v1370
    %2140 = vmatprep.subr.bf16.mxu0 %v1363
    %2141 = vmatpush2.bf16.msra.mxu0 %v1362
    %2142 = vmatprep.subr.bf16.mxu0 %v1355
    %2143 = vmatpush2.bf16.msra.mxu0 %v1354
    %2144 = vmatprep.mubr.bf16.mxu0 %v414
    %2145 = vmatmul.mubr.bf16.gmra.mxu0 %v413
    %v2146 = vpop.f32.mrf.mxu0
    %v2147 = vadd.f32 %v384, %v2146
    %v2148 = vpop.f32.mrf.mxu0
    %v2149 = vadd.f32 %v388, %v2148
    %v2150 = vpop.f32.mrf.mxu0
    %v2151 = vpop.f32.mrf.mxu0
    %2152 = vdwg.mxu0
    %2153 = vmatprep.subr.bf16.mxu0 %v1475
    %2154 = vmatpush1.bf16.msra.mxu0 %v1474
    %2155 = vmatprep.subr.bf16.mxu0 %v1467
    %2156 = vmatpush1.bf16.msra.mxu0 %v1466
    %2157 = vmatprep.subr.bf16.mxu0 %v1459
    %2158 = vmatpush1.bf16.msra.mxu0 %v1458
    %2159 = vmatprep.subr.bf16.mxu0 %v1451
    %2160 = vmatpush1.bf16.msra.mxu0 %v1450
    %2161 = vmatprep.subr.bf16.mxu0 %v1443
    %2162 = vmatpush1.bf16.msra.mxu0 %v1442
    %2163 = vmatprep.subr.bf16.mxu0 %v1435
    %2164 = vmatpush1.bf16.msra.mxu0 %v1434
    %2165 = vmatprep.subr.bf16.mxu0 %v1427
    %2166 = vmatpush1.bf16.msra.mxu0 %v1426
    %2167 = vmatprep.subr.bf16.mxu0 %v1419
    %2168 = vmatpush1.bf16.msra.mxu0 %v1418
    %2169 = vmatprep.subr.bf16.mxu0 %v1539
    %2170 = vmatpush2.bf16.msra.mxu0 %v1538
    %2171 = vmatprep.subr.bf16.mxu0 %v1531
    %2172 = vmatpush2.bf16.msra.mxu0 %v1530
    %2173 = vmatprep.subr.bf16.mxu0 %v1523
    %2174 = vmatpush2.bf16.msra.mxu0 %v1522
    %2175 = vmatprep.subr.bf16.mxu0 %v1515
    %2176 = vmatpush2.bf16.msra.mxu0 %v1514
    %2177 = vmatprep.subr.bf16.mxu0 %v1507
    %2178 = vmatpush2.bf16.msra.mxu0 %v1506
    %2179 = vmatprep.subr.bf16.mxu0 %v1499
    %2180 = vmatpush2.bf16.msra.mxu0 %v1498
    %2181 = vmatprep.subr.bf16.mxu0 %v1491
    %2182 = vmatpush2.bf16.msra.mxu0 %v1490
    %2183 = vmatprep.subr.bf16.mxu0 %v1483
    %2184 = vmatpush2.bf16.msra.mxu0 %v1482
    %2185 = vmatprep.mubr.bf16.mxu0 %v416
    %2186 = vmatmul.mubr.bf16.gmra.mxu0 %v415
    %v2187 = vpop.f32.mrf.mxu0
    %v2188 = vadd.f32 %v2147, %v2187
    %v2189 = vpop.f32.mrf.mxu0
    %v2190 = vadd.f32 %v2149, %v2189
    %v2191 = vpop.f32.mrf.mxu0
    %v2192 = vpop.f32.mrf.mxu0
    %2193 = vdwg.mxu0
    %2194 = vmatprep.subr.bf16.mxu0 0
    %2195 = vmatpush1.bf16.msra.mxu0 0
    %2196 = vmatprep.subr.bf16.mxu0 0
    %2197 = vmatpush1.bf16.msra.mxu0 0
    %2198 = vmatprep.subr.bf16.mxu0 0
    %2199 = vmatpush1.bf16.msra.mxu0 0
    %2200 = vmatprep.subr.bf16.mxu0 0
    %2201 = vmatpush1.bf16.msra.mxu0 0
    %2202 = vmatprep.subr.bf16.mxu0 %v1571
    %2203 = vmatpush1.bf16.msra.mxu0 %v1570
    %2204 = vmatprep.subr.bf16.mxu0 %v1563
    %2205 = vmatpush1.bf16.msra.mxu0 %v1562
    %2206 = vmatprep.subr.bf16.mxu0 %v1555
    %2207 = vmatpush1.bf16.msra.mxu0 %v1554
    %2208 = vmatprep.subr.bf16.mxu0 %v1547
    %2209 = vmatpush1.bf16.msra.mxu0 %v1546
    %2210 = vmatprep.subr.bf16.mxu0 0
    %2211 = vmatpush2.bf16.msra.mxu0 0
    %2212 = vmatprep.subr.bf16.mxu0 0
    %2213 = vmatpush2.bf16.msra.mxu0 0
    %2214 = vmatprep.subr.bf16.mxu0 0
    %2215 = vmatpush2.bf16.msra.mxu0 0
    %2216 = vmatprep.subr.bf16.mxu0 0
    %2217 = vmatpush2.bf16.msra.mxu0 0
    %2218 = vmatprep.subr.bf16.mxu0 0
    %2219 = vmatpush2.bf16.msra.mxu0 0
    %2220 = vmatprep.subr.bf16.mxu0 0
    %2221 = vmatpush2.bf16.msra.mxu0 0
    %2222 = vmatprep.subr.bf16.mxu0 0
    %2223 = vmatpush2.bf16.msra.mxu0 0
    %2224 = vmatprep.subr.bf16.mxu0 0
    %2225 = vmatpush2.bf16.msra.mxu0 0
    %2226 = vmatprep.mubr.bf16.mxu0 0
    %2227 = vmatmul.mubr.bf16.gmra.mxu0 %v1864
    %v2228 = vpop.f32.mrf.mxu0
    %v2229 = vadd.f32 %v2188, %v2228
    %v2230 = vpop.f32.mrf.mxu0
    %v2231 = vadd.f32 %v2190, %v2230
    %v2232 = vpop.f32.mrf.mxu0
    %v2233 = vpop.f32.mrf.mxu0
    %2234 = vdwg.mxu0
    %2235 = vmatprep.subr.bf16.mxu0 %v1349
    %2236 = vmatpush1.bf16.msra.mxu0 %v1348
    %2237 = vmatprep.subr.bf16.mxu0 %v1341
    %2238 = vmatpush1.bf16.msra.mxu0 %v1340
    %2239 = vmatprep.subr.bf16.mxu0 %v1333
    %2240 = vmatpush1.bf16.msra.mxu0 %v1332
    %2241 = vmatprep.subr.bf16.mxu0 %v1325
    %2242 = vmatpush1.bf16.msra.mxu0 %v1324
    %2243 = vmatprep.subr.bf16.mxu0 %v1317
    %2244 = vmatpush1.bf16.msra.mxu0 %v1316
    %2245 = vmatprep.subr.bf16.mxu0 %v1309
    %2246 = vmatpush1.bf16.msra.mxu0 %v1308
    %2247 = vmatprep.subr.bf16.mxu0 %v1301
    %2248 = vmatpush1.bf16.msra.mxu0 %v1300
    %2249 = vmatprep.subr.bf16.mxu0 %v1293
    %2250 = vmatpush1.bf16.msra.mxu0 %v1292
    %2251 = vmatprep.subr.bf16.mxu0 %v1413
    %2252 = vmatpush2.bf16.msra.mxu0 %v1412
    %2253 = vmatprep.subr.bf16.mxu0 %v1405
    %2254 = vmatpush2.bf16.msra.mxu0 %v1404
    %2255 = vmatprep.subr.bf16.mxu0 %v1397
    %2256 = vmatpush2.bf16.msra.mxu0 %v1396
    %2257 = vmatprep.subr.bf16.mxu0 %v1389
    %2258 = vmatpush2.bf16.msra.mxu0 %v1388
    %2259 = vmatprep.subr.bf16.mxu0 %v1381
    %2260 = vmatpush2.bf16.msra.mxu0 %v1380
    %2261 = vmatprep.subr.bf16.mxu0 %v1373
    %2262 = vmatpush2.bf16.msra.mxu0 %v1372
    %2263 = vmatprep.subr.bf16.mxu0 %v1365
    %2264 = vmatpush2.bf16.msra.mxu0 %v1364
    %2265 = vmatprep.subr.bf16.mxu0 %v1357
    %2266 = vmatpush2.bf16.msra.mxu0 %v1356
    %2267 = vmatprep.mubr.bf16.mxu0 %v414
    %2268 = vmatmul.mubr.bf16.gmra.mxu0 %v413
    %v2269 = vpop.f32.mrf.mxu0
    %v2270 = vadd.f32 %v392, %v2269
    %v2271 = vpop.f32.mrf.mxu0
    %v2272 = vadd.f32 %v396, %v2271
    %v2273 = vpop.f32.mrf.mxu0
    %v2274 = vpop.f32.mrf.mxu0
    %2275 = vdwg.mxu0
    %2276 = vmatprep.subr.bf16.mxu0 %v1477
    %2277 = vmatpush1.bf16.msra.mxu0 %v1476
    %2278 = vmatprep.subr.bf16.mxu0 %v1469
    %2279 = vmatpush1.bf16.msra.mxu0 %v1468
    %2280 = vmatprep.subr.bf16.mxu0 %v1461
    %2281 = vmatpush1.bf16.msra.mxu0 %v1460
    %2282 = vmatprep.subr.bf16.mxu0 %v1453
    %2283 = vmatpush1.bf16.msra.mxu0 %v1452
    %2284 = vmatprep.subr.bf16.mxu0 %v1445
    %2285 = vmatpush1.bf16.msra.mxu0 %v1444
    %2286 = vmatprep.subr.bf16.mxu0 %v1437
    %2287 = vmatpush1.bf16.msra.mxu0 %v1436
    %2288 = vmatprep.subr.bf16.mxu0 %v1429
    %2289 = vmatpush1.bf16.msra.mxu0 %v1428
    %2290 = vmatprep.subr.bf16.mxu0 %v1421
    %2291 = vmatpush1.bf16.msra.mxu0 %v1420
    %2292 = vmatprep.subr.bf16.mxu0 %v1541
    %2293 = vmatpush2.bf16.msra.mxu0 %v1540
    %2294 = vmatprep.subr.bf16.mxu0 %v1533
    %2295 = vmatpush2.bf16.msra.mxu0 %v1532
    %2296 = vmatprep.subr.bf16.mxu0 %v1525
    %2297 = vmatpush2.bf16.msra.mxu0 %v1524
    %2298 = vmatprep.subr.bf16.mxu0 %v1517
    %2299 = vmatpush2.bf16.msra.mxu0 %v1516
    %2300 = vmatprep.subr.bf16.mxu0 %v1509
    %2301 = vmatpush2.bf16.msra.mxu0 %v1508
    %2302 = vmatprep.subr.bf16.mxu0 %v1501
    %2303 = vmatpush2.bf16.msra.mxu0 %v1500
    %2304 = vmatprep.subr.bf16.mxu0 %v1493
    %2305 = vmatpush2.bf16.msra.mxu0 %v1492
    %2306 = vmatprep.subr.bf16.mxu0 %v1485
    %2307 = vmatpush2.bf16.msra.mxu0 %v1484
    %2308 = vmatprep.mubr.bf16.mxu0 %v416
    %2309 = vmatmul.mubr.bf16.gmra.mxu0 %v415
    %v2310 = vpop.f32.mrf.mxu0
    %v2311 = vadd.f32 %v2270, %v2310
    %v2312 = vpop.f32.mrf.mxu0
    %v2313 = vadd.f32 %v2272, %v2312
    %v2314 = vpop.f32.mrf.mxu0
    %v2315 = vpop.f32.mrf.mxu0
    %2316 = vdwg.mxu0
    %2317 = vmatprep.subr.bf16.mxu0 0
    %2318 = vmatpush1.bf16.msra.mxu0 0
    %2319 = vmatprep.subr.bf16.mxu0 0
    %2320 = vmatpush1.bf16.msra.mxu0 0
    %2321 = vmatprep.subr.bf16.mxu0 0
    %2322 = vmatpush1.bf16.msra.mxu0 0
    %2323 = vmatprep.subr.bf16.mxu0 0
    %2324 = vmatpush1.bf16.msra.mxu0 0
    %2325 = vmatprep.subr.bf16.mxu0 %v1573
    %2326 = vmatpush1.bf16.msra.mxu0 %v1572
    %2327 = vmatprep.subr.bf16.mxu0 %v1565
    %2328 = vmatpush1.bf16.msra.mxu0 %v1564
    %2329 = vmatprep.subr.bf16.mxu0 %v1557
    %2330 = vmatpush1.bf16.msra.mxu0 %v1556
    %2331 = vmatprep.subr.bf16.mxu0 %v1549
    %2332 = vmatpush1.bf16.msra.mxu0 %v1548
    %2333 = vmatprep.subr.bf16.mxu0 0
    %2334 = vmatpush2.bf16.msra.mxu0 0
    %2335 = vmatprep.subr.bf16.mxu0 0
    %2336 = vmatpush2.bf16.msra.mxu0 0
    %2337 = vmatprep.subr.bf16.mxu0 0
    %2338 = vmatpush2.bf16.msra.mxu0 0
    %2339 = vmatprep.subr.bf16.mxu0 0
    %2340 = vmatpush2.bf16.msra.mxu0 0
    %2341 = vmatprep.subr.bf16.mxu0 0
    %2342 = vmatpush2.bf16.msra.mxu0 0
    %2343 = vmatprep.subr.bf16.mxu0 0
    %2344 = vmatpush2.bf16.msra.mxu0 0
    %2345 = vmatprep.subr.bf16.mxu0 0
    %2346 = vmatpush2.bf16.msra.mxu0 0
    %2347 = vmatprep.subr.bf16.mxu0 0
    %2348 = vmatpush2.bf16.msra.mxu0 0
    %2349 = vmatprep.mubr.bf16.mxu0 0
    %2350 = vmatmul.mubr.bf16.gmra.mxu0 %v1864
    %v2351 = vpop.f32.mrf.mxu0
    %v2352 = vadd.f32 %v2311, %v2351
    %v2353 = vpop.f32.mrf.mxu0
    %v2354 = vadd.f32 %v2313, %v2353
    %v2355 = vpop.f32.mrf.mxu0
    %v2356 = vpop.f32.mrf.mxu0
    %2357 = vdwg.mxu0
    %v2358 = vadd.f32 %v1983, 3.0
    %v2359 = vadd.f32 %v1985, 3.0
    %v2360 = vadd.f32 %v2106, 3.0
    %v2361 = vadd.f32 %v2108, 3.0
    %v2362 = vadd.f32 %v2229, 3.0
    %v2363 = vadd.f32 %v2231, 3.0
    %v2364 = vadd.f32 %v2352, 3.0
    %v2365 = vadd.f32 %v2354, 3.0
    %v2366 = vmax.f32 %v2358, 0.0
    %v2367 = vmax.f32 %v2359, 0.0
    %v2368 = vmax.f32 %v2360, 0.0
    %v2369 = vmax.f32 %v2361, 0.0
    %v2370 = vmax.f32 %v2362, 0.0
    %v2371 = vmax.f32 %v2363, 0.0
    %v2372 = vmax.f32 %v2364, 0.0
    %v2373 = vmax.f32 %v2365, 0.0
    %v2374 = vmin.f32 %v2366, 6.0
    %v2375 = vmin.f32 %v2367, 6.0
    %v2376 = vmin.f32 %v2368, 6.0
    %v2377 = vmin.f32 %v2369, 6.0
    %v2378 = vmin.f32 %v2370, 6.0
    %v2379 = vmin.f32 %v2371, 6.0
    %v2380 = vmin.f32 %v2372, 6.0
    %v2381 = vmin.f32 %v2373, 6.0
    %v2382 = vmul.f32 %v1983, %v2374
    %v2383 = vmul.f32 %v1985, %v2375
    %v2384 = vmul.f32 %v2106, %v2376
    %v2385 = vmul.f32 %v2108, %v2377
    %v2386 = vmul.f32 %v2229, %v2378
    %v2387 = vmul.f32 %v2231, %v2379
    %v2388 = vmul.f32 %v2352, %v2380
    %v2389 = vmul.f32 %v2354, %v2381
    %v2390 = vmul.f32 %v2382, 0.16666667
    %v2391 = vmul.f32 %v2383, 0.16666667
    %v2392 = vmul.f32 %v2384, 0.16666667
    %v2393 = vmul.f32 %v2385, 0.16666667
    %v2394 = vmul.f32 %v2386, 0.16666667
    %v2395 = vmul.f32 %v2387, 0.16666667
    %v2396 = vmul.f32 %v2388, 0.16666667
    %v2397 = vmul.f32 %v2389, 0.16666667
    %v2398 = vpack.c.bf16 %v2390, %v2390
    %v2399 = vpack.c.bf16 %v2391, %v2391
    %v2400 = vpack.c.bf16 %v2392, %v2392
    %v2401 = vpack.c.bf16 %v2393, %v2393
    %v2402 = vpack.c.bf16 %v2394, %v2394
    %v2403 = vpack.c.bf16 %v2395, %v2395
    %v2404 = vpack.c.bf16 %v2396, %v2396
    %v2405 = vpack.c.bf16 %v2397, %v2397
    %v2406 = vld [vmem:[#allocation6] sm:$0xf]
    %v2407 = vld [vmem:[#allocation6 + $0x4] sm:$0xf]
    %v2408 = vld [vmem:[#allocation6 + $0x8] sm:$0xf]
    %v2409 = vld [vmem:[#allocation6 + $0xc] sm:$0xf]
    %v2410 = vld [vmem:[#allocation6 + $0x10] sm:$0xf]
    %v2411 = vld [vmem:[#allocation6 + $0x14] sm:$0xf]
    %v2412 = vld [vmem:[#allocation6 + $0x18] sm:$0xf]
    %v2413 = vld [vmem:[#allocation6 + $0x1c] sm:$0xf]
    %v2414 = vld [vmem:[#allocation6 + $0x20] sm:$0xf]
    %v2415 = vld [vmem:[#allocation6 + $0x24] sm:$0xf]
    %v2416 = vld [vmem:[#allocation6 + $0x28] sm:$0xf]
    %v2417 = vld [vmem:[#allocation6 + $0x2c] sm:$0xf]
    %v2418 = vld [vmem:[#allocation6 + $0x30] sm:$0xf]
    %v2419 = vld [vmem:[#allocation6 + $0x34] sm:$0xf]
    %v2420 = vld [vmem:[#allocation6 + $0x38] sm:$0xf]
    %v2421 = vld [vmem:[#allocation6 + $0x3c] sm:$0xf]
    %v2422 = vld [vmem:[#allocation6 + $0x40] sm:$0xf]
    %v2423 = vld [vmem:[#allocation6 + $0x44] sm:$0xf]
    %v2424 = vld [vmem:[#allocation6 + $0x48] sm:$0xf]
    %v2425 = vld [vmem:[#allocation6 + $0x4c] sm:$0xf]
    %v2426 = vld [vmem:[#allocation6 + $0x50] sm:$0xf]
    %v2427 = vld [vmem:[#allocation6 + $0x54] sm:$0xf]
    %v2428 = vld [vmem:[#allocation6 + $0x58] sm:$0xf]
    %v2429 = vld [vmem:[#allocation6 + $0x5c] sm:$0xf]
    %v2430 = vld [vmem:[#allocation6 + $0x60] sm:$0xf]
    %v2431 = vld [vmem:[#allocation6 + $0x64] sm:$0xf]
    %v2432 = vld [vmem:[#allocation6 + $0x68] sm:$0xf]
    %v2433 = vld [vmem:[#allocation6 + $0x6c] sm:$0xf]
    %v2434 = vld [vmem:[#allocation6 + $0x70] sm:$0xf]
    %v2435 = vld [vmem:[#allocation6 + $0x74] sm:$0xf]
    %v2436 = vld [vmem:[#allocation6 + $0x78] sm:$0xf]
    %v2437 = vld [vmem:[#allocation6 + $0x7c] sm:$0xf]
    %v2438 = vld [vmem:[#allocation6 + $0x80] sm:$0xf]
    %v2439 = vld [vmem:[#allocation6 + $0x84] sm:$0xf]
    %v2440 = vld [vmem:[#allocation6 + $0x88] sm:$0xf]
    %v2441 = vld [vmem:[#allocation6 + $0x8c] sm:$0xf]
    %v2442 = vld [vmem:[#allocation6 + $0x90] sm:$0xf]
    %v2443 = vld [vmem:[#allocation6 + $0x94] sm:$0xf]
    %v2444 = vld [vmem:[#allocation6 + $0x98] sm:$0xf]
    %v2445 = vld [vmem:[#allocation6 + $0x9c] sm:$0xf]
    %v2446 = vld [vmem:[#allocation6 + $0xa0] sm:$0xf]
    %v2447 = vld [vmem:[#allocation6 + $0xa4] sm:$0xf]
    %v2448 = vld [vmem:[#allocation6 + $0xa8] sm:$0xf]
    %v2449 = vld [vmem:[#allocation6 + $0xac] sm:$0xf]
    %v2450 = vld [vmem:[#allocation6 + $0xb0] sm:$0xf]
    %v2451 = vld [vmem:[#allocation6 + $0xb4] sm:$0xf]
    %v2452 = vld [vmem:[#allocation6 + $0xb8] sm:$0xf]
    %v2453 = vld [vmem:[#allocation6 + $0xbc] sm:$0xf]
    %v2454 = vld [vmem:[#allocation6 + $0xc0] sm:$0xf]
    %v2455 = vld [vmem:[#allocation6 + $0xc4] sm:$0xf]
    %v2456 = vld [vmem:[#allocation6 + $0xc8] sm:$0xf]
    %v2457 = vld [vmem:[#allocation6 + $0xcc] sm:$0xf]
    %v2458 = vld [vmem:[#allocation6 + $0xd0] sm:$0xf]
    %v2459 = vld [vmem:[#allocation6 + $0xd4] sm:$0xf]
    %v2460 = vld [vmem:[#allocation6 + $0xd8] sm:$0xf]
    %v2461 = vld [vmem:[#allocation6 + $0xdc] sm:$0xf]
    %v2462 = vld [vmem:[#allocation6 + $0xe0] sm:$0xf]
    %v2463 = vld [vmem:[#allocation6 + $0xe4] sm:$0xf]
    %v2464 = vld [vmem:[#allocation6 + $0xe8] sm:$0xf]
    %v2465 = vld [vmem:[#allocation6 + $0xec] sm:$0xf]
    %v2466 = vld [vmem:[#allocation6 + $0xf0] sm:$0xf]
    %v2467 = vld [vmem:[#allocation6 + $0xf4] sm:$0xf]
    %v2468 = vld [vmem:[#allocation6 + $0xf8] sm:$0xf]
    %v2469 = vld [vmem:[#allocation6 + $0xfc] sm:$0xf]
    %v2470 = vld [vmem:[#allocation6 + $0x100] sm:$0xf]
    %v2471 = vld [vmem:[#allocation6 + $0x104] sm:$0xf]
    %v2472 = vld [vmem:[#allocation6 + $0x108] sm:$0xf]
    %v2473 = vld [vmem:[#allocation6 + $0x10c] sm:$0xf]
    %v2474 = vld [vmem:[#allocation6 + $0x110] sm:$0xf]
    %v2475 = vld [vmem:[#allocation6 + $0x114] sm:$0xf]
    %v2476 = vld [vmem:[#allocation6 + $0x118] sm:$0xf]
    %v2477 = vld [vmem:[#allocation6 + $0x11c] sm:$0xf]
    %v2478 = vld [vmem:[#allocation6 + $0x120] sm:$0xf]
    %v2479 = vld [vmem:[#allocation6 + $0x124] sm:$0xf]
    %v2480 = vld [vmem:[#allocation6 + $0x128] sm:$0xf]
    %v2481 = vld [vmem:[#allocation6 + $0x12c] sm:$0xf]
    %v2482 = vld [vmem:[#allocation6 + $0x130] sm:$0xf]
    %v2483 = vld [vmem:[#allocation6 + $0x134] sm:$0xf]
    %v2484 = vld [vmem:[#allocation6 + $0x138] sm:$0xf]
    %v2485 = vld [vmem:[#allocation6 + $0x13c] sm:$0xf]
    %v2486 = vld [vmem:[#allocation6 + $0x140] sm:$0xf]
    %v2487 = vld [vmem:[#allocation6 + $0x144] sm:$0xf]
    %v2488 = vld [vmem:[#allocation6 + $0x148] sm:$0xf]
    %v2489 = vld [vmem:[#allocation6 + $0x14c] sm:$0xf]
    %v2490 = vld [vmem:[#allocation6 + $0x150] sm:$0xf]
    %v2491 = vld [vmem:[#allocation6 + $0x154] sm:$0xf]
    %v2492 = vld [vmem:[#allocation6 + $0x158] sm:$0xf]
    %v2493 = vld [vmem:[#allocation6 + $0x15c] sm:$0xf]
    %v2494 = vld [vmem:[#allocation6 + $0x160] sm:$0xf]
    %v2495 = vld [vmem:[#allocation6 + $0x164] sm:$0xf]
    %v2496 = vld [vmem:[#allocation6 + $0x168] sm:$0xf]
    %v2497 = vld [vmem:[#allocation6 + $0x16c] sm:$0xf]
    %v2498 = vld [vmem:[#allocation6 + $0x170] sm:$0xf]
    %v2499 = vld [vmem:[#allocation6 + $0x174] sm:$0xf]
    %v2500 = vld [vmem:[#allocation6 + $0x178] sm:$0xf]
    %v2501 = vld [vmem:[#allocation6 + $0x17c] sm:$0xf]
    %v2502 = vld [vmem:[#allocation6 + $0x180] sm:$0xf]
    %v2503 = vld [vmem:[#allocation6 + $0x184] sm:$0xf]
    %v2504 = vld [vmem:[#allocation6 + $0x188] sm:$0xf]
    %v2505 = vld [vmem:[#allocation6 + $0x18c] sm:$0xf]
    %v2506 = vld [vmem:[#allocation6 + $0x190] sm:$0xf]
    %v2507 = vld [vmem:[#allocation6 + $0x194] sm:$0xf]
    %v2508 = vld [vmem:[#allocation6 + $0x198] sm:$0xf]
    %v2509 = vld [vmem:[#allocation6 + $0x19c] sm:$0xf]
    %v2510 = vld [vmem:[#allocation6 + $0x1a0] sm:$0xf]
    %v2511 = vld [vmem:[#allocation6 + $0x1a4] sm:$0xf]
    %v2512 = vld [vmem:[#allocation6 + $0x1a8] sm:$0xf]
    %v2513 = vld [vmem:[#allocation6 + $0x1ac] sm:$0xf]
    %v2514 = vld [vmem:[#allocation6 + $0x1b0] sm:$0xf]
    %v2515 = vld [vmem:[#allocation6 + $0x1b4] sm:$0xf]
    %v2516 = vld [vmem:[#allocation6 + $0x1b8] sm:$0xf]
    %v2517 = vld [vmem:[#allocation6 + $0x1bc] sm:$0xf]
    %v2518 = vld [vmem:[#allocation6 + $0x1c0] sm:$0xf]
    %v2519 = vld [vmem:[#allocation6 + $0x1c4] sm:$0xf]
    %v2520 = vld [vmem:[#allocation6 + $0x1c8] sm:$0xf]
    %v2521 = vld [vmem:[#allocation6 + $0x1cc] sm:$0xf]
    %v2522 = vld [vmem:[#allocation6 + $0x1d0] sm:$0xf]
    %v2523 = vld [vmem:[#allocation6 + $0x1d4] sm:$0xf]
    %v2524 = vld [vmem:[#allocation6 + $0x1d8] sm:$0xf]
    %v2525 = vld [vmem:[#allocation6 + $0x1dc] sm:$0xf]
    %v2526 = vld [vmem:[#allocation6 + $0x1e0] sm:$0xf]
    %v2527 = vld [vmem:[#allocation6 + $0x1e4] sm:$0xf]
    %v2528 = vld [vmem:[#allocation6 + $0x1e8] sm:$0xf]
    %v2529 = vld [vmem:[#allocation6 + $0x1ec] sm:$0xf]
    %v2530 = vld [vmem:[#allocation6 + $0x1f0] sm:$0xf]
    %v2531 = vld [vmem:[#allocation6 + $0x1f4] sm:$0xf]
    %v2532 = vld [vmem:[#allocation6 + $0x1f8] sm:$0xf]
    %v2533 = vld [vmem:[#allocation6 + $0x1fc] sm:$0xf]
    %v2534 = vld [vmem:[#allocation7] sm:$0x1]
    %v2536 = vlaneseq
    %v2537 = vshrl.u32 %v2536, 7
    %v2538 = vsub.s32 0, %v2537
    %v2539 = vrot.slane %v2534, %v2538
    %v2669 = vunpack.c.l.b16 %v2406
    %v2670 = vunpack.c.l.b16 %v2407
    %v2671 = vunpack.c.l.b16 %v2408
    %v2672 = vunpack.c.l.b16 %v2409
    %v2673 = vunpack.c.l.b16 %v2410
    %v2674 = vunpack.c.l.b16 %v2411
    %v2675 = vunpack.c.l.b16 %v2412
    %v2676 = vunpack.c.l.b16 %v2413
    %v2677 = vunpack.c.l.b16 %v2414
    %v2678 = vunpack.c.l.b16 %v2415
    %v2679 = vunpack.c.l.b16 %v2416
    %v2680 = vunpack.c.l.b16 %v2417
    %v2681 = vunpack.c.l.b16 %v2418
    %v2682 = vunpack.c.l.b16 %v2419
    %v2683 = vunpack.c.l.b16 %v2420
    %v2684 = vunpack.c.l.b16 %v2421
    %v2685 = vunpack.c.l.b16 %v2422
    %v2686 = vunpack.c.l.b16 %v2423
    %v2687 = vunpack.c.l.b16 %v2424
    %v2688 = vunpack.c.l.b16 %v2425
    %v2689 = vunpack.c.l.b16 %v2426
    %v2690 = vunpack.c.l.b16 %v2427
    %v2691 = vunpack.c.l.b16 %v2428
    %v2692 = vunpack.c.l.b16 %v2429
    %v2693 = vunpack.c.l.b16 %v2430
    %v2694 = vunpack.c.l.b16 %v2431
    %v2695 = vunpack.c.l.b16 %v2432
    %v2696 = vunpack.c.l.b16 %v2433
    %v2697 = vunpack.c.l.b16 %v2434
    %v2698 = vunpack.c.l.b16 %v2435
    %v2699 = vunpack.c.l.b16 %v2436
    %v2700 = vunpack.c.l.b16 %v2437
    %v2701 = vunpack.c.l.b16 %v2438
    %v2702 = vunpack.c.l.b16 %v2439
    %v2703 = vunpack.c.l.b16 %v2440
    %v2704 = vunpack.c.l.b16 %v2441
    %v2705 = vunpack.c.l.b16 %v2442
    %v2706 = vunpack.c.l.b16 %v2443
    %v2707 = vunpack.c.l.b16 %v2444
    %v2708 = vunpack.c.l.b16 %v2445
    %v2709 = vunpack.c.l.b16 %v2446
    %v2710 = vunpack.c.l.b16 %v2447
    %v2711 = vunpack.c.l.b16 %v2448
    %v2712 = vunpack.c.l.b16 %v2449
    %v2713 = vunpack.c.l.b16 %v2450
    %v2714 = vunpack.c.l.b16 %v2451
    %v2715 = vunpack.c.l.b16 %v2452
    %v2716 = vunpack.c.l.b16 %v2453
    %v2717 = vunpack.c.l.b16 %v2454
    %v2718 = vunpack.c.l.b16 %v2455
    %v2719 = vunpack.c.l.b16 %v2456
    %v2720 = vunpack.c.l.b16 %v2457
    %v2721 = vunpack.c.l.b16 %v2458
    %v2722 = vunpack.c.l.b16 %v2459
    %v2723 = vunpack.c.l.b16 %v2460
    %v2724 = vunpack.c.l.b16 %v2461
    %v2725 = vunpack.c.l.b16 %v2462
    %v2726 = vunpack.c.l.b16 %v2463
    %v2727 = vunpack.c.l.b16 %v2464
    %v2728 = vunpack.c.l.b16 %v2465
    %v2729 = vunpack.c.l.b16 %v2466
    %v2730 = vunpack.c.l.b16 %v2467
    %v2731 = vunpack.c.l.b16 %v2468
    %v2732 = vunpack.c.l.b16 %v2469
    %v2733 = vunpack.c.l.b16 %v2470
    %v2734 = vunpack.c.l.b16 %v2471
    %v2735 = vunpack.c.l.b16 %v2472
    %v2736 = vunpack.c.l.b16 %v2473
    %v2737 = vunpack.c.l.b16 %v2474
    %v2738 = vunpack.c.l.b16 %v2475
    %v2739 = vunpack.c.l.b16 %v2476
    %v2740 = vunpack.c.l.b16 %v2477
    %v2741 = vunpack.c.l.b16 %v2478
    %v2742 = vunpack.c.l.b16 %v2479
    %v2743 = vunpack.c.l.b16 %v2480
    %v2744 = vunpack.c.l.b16 %v2481
    %v2745 = vunpack.c.l.b16 %v2482
    %v2746 = vunpack.c.l.b16 %v2483
    %v2747 = vunpack.c.l.b16 %v2484
    %v2748 = vunpack.c.l.b16 %v2485
    %v2749 = vunpack.c.l.b16 %v2486
    %v2750 = vunpack.c.l.b16 %v2487
    %v2751 = vunpack.c.l.b16 %v2488
    %v2752 = vunpack.c.l.b16 %v2489
    %v2753 = vunpack.c.l.b16 %v2490
    %v2754 = vunpack.c.l.b16 %v2491
    %v2755 = vunpack.c.l.b16 %v2492
    %v2756 = vunpack.c.l.b16 %v2493
    %v2757 = vunpack.c.l.b16 %v2494
    %v2758 = vunpack.c.l.b16 %v2495
    %v2759 = vunpack.c.l.b16 %v2496
    %v2760 = vunpack.c.l.b16 %v2497
    %v2761 = vunpack.c.l.b16 %v2498
    %v2762 = vunpack.c.l.b16 %v2499
    %v2763 = vunpack.c.l.b16 %v2500
    %v2764 = vunpack.c.l.b16 %v2501
    %v2765 = vunpack.c.l.b16 %v2502
    %v2766 = vunpack.c.l.b16 %v2503
    %v2767 = vunpack.c.l.b16 %v2504
    %v2768 = vunpack.c.l.b16 %v2505
    %v2769 = vunpack.c.l.b16 %v2506
    %v2770 = vunpack.c.l.b16 %v2507
    %v2771 = vunpack.c.l.b16 %v2508
    %v2772 = vunpack.c.l.b16 %v2509
    %v2773 = vunpack.c.l.b16 %v2510
    %v2774 = vunpack.c.l.b16 %v2511
    %v2775 = vunpack.c.l.b16 %v2512
    %v2776 = vunpack.c.l.b16 %v2513
    %v2777 = vunpack.c.l.b16 %v2514
    %v2778 = vunpack.c.l.b16 %v2515
    %v2779 = vunpack.c.l.b16 %v2516
    %v2780 = vunpack.c.l.b16 %v2517
    %v2781 = vunpack.c.l.b16 %v2518
    %v2782 = vunpack.c.l.b16 %v2519
    %v2783 = vunpack.c.l.b16 %v2520
    %v2784 = vunpack.c.l.b16 %v2521
    %v2785 = vunpack.c.l.b16 %v2522
    %v2786 = vunpack.c.l.b16 %v2523
    %v2787 = vunpack.c.l.b16 %v2524
    %v2788 = vunpack.c.l.b16 %v2525
    %v2789 = vunpack.c.l.b16 %v2526
    %v2790 = vunpack.c.l.b16 %v2527
    %v2791 = vunpack.c.l.b16 %v2528
    %v2792 = vunpack.c.l.b16 %v2529
    %v2793 = vunpack.c.l.b16 %v2530
    %v2794 = vunpack.c.l.b16 %v2531
    %v2795 = vunpack.c.l.b16 %v2532
    %v2796 = vunpack.c.l.b16 %v2533
    %v2797 = vpack.c.b16 %v2670, %v2669
    %v2798 = vpack.c.b16 %v2672, %v2671
    %v2799 = vpack.c.b16 %v2674, %v2673
    %v2800 = vpack.c.b16 %v2676, %v2675
    %v2801 = vpack.c.b16 %v2678, %v2677
    %v2802 = vpack.c.b16 %v2680, %v2679
    %v2803 = vpack.c.b16 %v2682, %v2681
    %v2804 = vpack.c.b16 %v2684, %v2683
    %v2805 = vpack.c.b16 %v2686, %v2685
    %v2806 = vpack.c.b16 %v2688, %v2687
    %v2807 = vpack.c.b16 %v2690, %v2689
    %v2808 = vpack.c.b16 %v2692, %v2691
    %v2809 = vpack.c.b16 %v2694, %v2693
    %v2810 = vpack.c.b16 %v2696, %v2695
    %v2811 = vpack.c.b16 %v2698, %v2697
    %v2812 = vpack.c.b16 %v2700, %v2699
    %v2813 = vpack.c.b16 %v2702, %v2701
    %v2814 = vpack.c.b16 %v2704, %v2703
    %v2815 = vpack.c.b16 %v2706, %v2705
    %v2816 = vpack.c.b16 %v2708, %v2707
    %v2817 = vpack.c.b16 %v2710, %v2709
    %v2818 = vpack.c.b16 %v2712, %v2711
    %v2819 = vpack.c.b16 %v2714, %v2713
    %v2820 = vpack.c.b16 %v2716, %v2715
    %v2821 = vpack.c.b16 %v2718, %v2717
    %v2822 = vpack.c.b16 %v2720, %v2719
    %v2823 = vpack.c.b16 %v2722, %v2721
    %v2824 = vpack.c.b16 %v2724, %v2723
    %v2825 = vpack.c.b16 %v2726, %v2725
    %v2826 = vpack.c.b16 %v2728, %v2727
    %v2827 = vpack.c.b16 %v2730, %v2729
    %v2828 = vpack.c.b16 %v2732, %v2731
    %v2829 = vpack.c.b16 %v2734, %v2733
    %v2830 = vpack.c.b16 %v2736, %v2735
    %v2831 = vpack.c.b16 %v2738, %v2737
    %v2832 = vpack.c.b16 %v2740, %v2739
    %v2833 = vpack.c.b16 %v2742, %v2741
    %v2834 = vpack.c.b16 %v2744, %v2743
    %v2835 = vpack.c.b16 %v2746, %v2745
    %v2836 = vpack.c.b16 %v2748, %v2747
    %v2837 = vpack.c.b16 %v2750, %v2749
    %v2838 = vpack.c.b16 %v2752, %v2751
    %v2839 = vpack.c.b16 %v2754, %v2753
    %v2840 = vpack.c.b16 %v2756, %v2755
    %v2841 = vpack.c.b16 %v2758, %v2757
    %v2842 = vpack.c.b16 %v2760, %v2759
    %v2843 = vpack.c.b16 %v2762, %v2761
    %v2844 = vpack.c.b16 %v2764, %v2763
    %v2845 = vpack.c.b16 %v2766, %v2765
    %v2846 = vpack.c.b16 %v2768, %v2767
    %v2847 = vpack.c.b16 %v2770, %v2769
    %v2848 = vpack.c.b16 %v2772, %v2771
    %v2849 = vpack.c.b16 %v2774, %v2773
    %v2850 = vpack.c.b16 %v2776, %v2775
    %v2851 = vpack.c.b16 %v2778, %v2777
    %v2852 = vpack.c.b16 %v2780, %v2779
    %v2853 = vpack.c.b16 %v2782, %v2781
    %v2854 = vpack.c.b16 %v2784, %v2783
    %v2855 = vpack.c.b16 %v2786, %v2785
    %v2856 = vpack.c.b16 %v2788, %v2787
    %v2857 = vpack.c.b16 %v2790, %v2789
    %v2858 = vpack.c.b16 %v2792, %v2791
    %v2859 = vpack.c.b16 %v2794, %v2793
    %v2860 = vpack.c.b16 %v2796, %v2795
    %2925 = vmatprep.subr.bf16.mxu0 0
    %2926 = vmatpush1.bf16.msra.mxu0 %v2804
    %2927 = vmatprep.subr.bf16.mxu0 0
    %2928 = vmatpush1.bf16.msra.mxu0 %v2803
    %2929 = vmatprep.subr.bf16.mxu0 0
    %2930 = vmatpush1.bf16.msra.mxu0 %v2802
    %2931 = vmatprep.subr.bf16.mxu0 0
    %2932 = vmatpush1.bf16.msra.mxu0 %v2801
    %2933 = vmatprep.subr.bf16.mxu0 0
    %2934 = vmatpush1.bf16.msra.mxu0 %v2800
    %2935 = vmatprep.subr.bf16.mxu0 0
    %2936 = vmatpush1.bf16.msra.mxu0 %v2799
    %2937 = vmatprep.subr.bf16.mxu0 0
    %2938 = vmatpush1.bf16.msra.mxu0 %v2798
    %2939 = vmatprep.subr.bf16.mxu0 0
    %2940 = vmatpush1.bf16.msra.mxu0 %v2797
    %2941 = vmatprep.subr.bf16.mxu0 0
    %2942 = vmatpush2.bf16.msra.mxu0 %v2812
    %2943 = vmatprep.subr.bf16.mxu0 0
    %2944 = vmatpush2.bf16.msra.mxu0 %v2811
    %2945 = vmatprep.subr.bf16.mxu0 0
    %2946 = vmatpush2.bf16.msra.mxu0 %v2810
    %2947 = vmatprep.subr.bf16.mxu0 0
    %2948 = vmatpush2.bf16.msra.mxu0 %v2809
    %2949 = vmatprep.subr.bf16.mxu0 0
    %2950 = vmatpush2.bf16.msra.mxu0 %v2808
    %2951 = vmatprep.subr.bf16.mxu0 0
    %2952 = vmatpush2.bf16.msra.mxu0 %v2807
    %2953 = vmatprep.subr.bf16.mxu0 0
    %2954 = vmatpush2.bf16.msra.mxu0 %v2806
    %2955 = vmatprep.subr.bf16.mxu0 0
    %2956 = vmatpush2.bf16.msra.mxu0 %v2805
    %2957 = vmatprep.mubr.bf16.mxu0 %v2399
    %2958 = vmatmul.mubr.bf16.gmra.mxu0 %v2398
    %v2959 = vpop.f32.mrf.mxu0
    %v2960 = vadd.f32 %v2539, %v2959
    %v2961 = vpop.f32.mrf.mxu0
    %v2962 = vpop.f32.mrf.mxu0
    %v2963 = vpop.f32.mrf.mxu0
    %2964 = vdwg.mxu0
    %2965 = vmatprep.subr.bf16.mxu0 0
    %2966 = vmatpush1.bf16.msra.mxu0 %v2820
    %2967 = vmatprep.subr.bf16.mxu0 0
    %2968 = vmatpush1.bf16.msra.mxu0 %v2819
    %2969 = vmatprep.subr.bf16.mxu0 0
    %2970 = vmatpush1.bf16.msra.mxu0 %v2818
    %2971 = vmatprep.subr.bf16.mxu0 0
    %2972 = vmatpush1.bf16.msra.mxu0 %v2817
    %2973 = vmatprep.subr.bf16.mxu0 0
    %2974 = vmatpush1.bf16.msra.mxu0 %v2816
    %2975 = vmatprep.subr.bf16.mxu0 0
    %2976 = vmatpush1.bf16.msra.mxu0 %v2815
    %2977 = vmatprep.subr.bf16.mxu0 0
    %2978 = vmatpush1.bf16.msra.mxu0 %v2814
    %2979 = vmatprep.subr.bf16.mxu0 0
    %2980 = vmatpush1.bf16.msra.mxu0 %v2813
    %2981 = vmatprep.subr.bf16.mxu0 0
    %2982 = vmatpush2.bf16.msra.mxu0 %v2828
    %2983 = vmatprep.subr.bf16.mxu0 0
    %2984 = vmatpush2.bf16.msra.mxu0 %v2827
    %2985 = vmatprep.subr.bf16.mxu0 0
    %2986 = vmatpush2.bf16.msra.mxu0 %v2826
    %2987 = vmatprep.subr.bf16.mxu0 0
    %2988 = vmatpush2.bf16.msra.mxu0 %v2825
    %2989 = vmatprep.subr.bf16.mxu0 0
    %2990 = vmatpush2.bf16.msra.mxu0 %v2824
    %2991 = vmatprep.subr.bf16.mxu0 0
    %2992 = vmatpush2.bf16.msra.mxu0 %v2823
    %2993 = vmatprep.subr.bf16.mxu0 0
    %2994 = vmatpush2.bf16.msra.mxu0 %v2822
    %2995 = vmatprep.subr.bf16.mxu0 0
    %2996 = vmatpush2.bf16.msra.mxu0 %v2821
    %2997 = vmatprep.mubr.bf16.mxu0 %v2401
    %2998 = vmatmul.mubr.bf16.gmra.mxu0 %v2400
    %v2999 = vpop.f32.mrf.mxu0
    %v3000 = vadd.f32 %v2960, %v2999
    %v3001 = vpop.f32.mrf.mxu0
    %v3002 = vpop.f32.mrf.mxu0
    %v3003 = vpop.f32.mrf.mxu0
    %3004 = vdwg.mxu0
    %3005 = vmatprep.subr.bf16.mxu0 0
    %3006 = vmatpush1.bf16.msra.mxu0 %v2836
    %3007 = vmatprep.subr.bf16.mxu0 0
    %3008 = vmatpush1.bf16.msra.mxu0 %v2835
    %3009 = vmatprep.subr.bf16.mxu0 0
    %3010 = vmatpush1.bf16.msra.mxu0 %v2834
    %3011 = vmatprep.subr.bf16.mxu0 0
    %3012 = vmatpush1.bf16.msra.mxu0 %v2833
    %3013 = vmatprep.subr.bf16.mxu0 0
    %3014 = vmatpush1.bf16.msra.mxu0 %v2832
    %3015 = vmatprep.subr.bf16.mxu0 0
    %3016 = vmatpush1.bf16.msra.mxu0 %v2831
    %3017 = vmatprep.subr.bf16.mxu0 0
    %3018 = vmatpush1.bf16.msra.mxu0 %v2830
    %3019 = vmatprep.subr.bf16.mxu0 0
    %3020 = vmatpush1.bf16.msra.mxu0 %v2829
    %3021 = vmatprep.subr.bf16.mxu0 0
    %3022 = vmatpush2.bf16.msra.mxu0 %v2844
    %3023 = vmatprep.subr.bf16.mxu0 0
    %3024 = vmatpush2.bf16.msra.mxu0 %v2843
    %3025 = vmatprep.subr.bf16.mxu0 0
    %3026 = vmatpush2.bf16.msra.mxu0 %v2842
    %3027 = vmatprep.subr.bf16.mxu0 0
    %3028 = vmatpush2.bf16.msra.mxu0 %v2841
    %3029 = vmatprep.subr.bf16.mxu0 0
    %3030 = vmatpush2.bf16.msra.mxu0 %v2840
    %3031 = vmatprep.subr.bf16.mxu0 0
    %3032 = vmatpush2.bf16.msra.mxu0 %v2839
    %3033 = vmatprep.subr.bf16.mxu0 0
    %3034 = vmatpush2.bf16.msra.mxu0 %v2838
    %3035 = vmatprep.subr.bf16.mxu0 0
    %3036 = vmatpush2.bf16.msra.mxu0 %v2837
    %3037 = vmatprep.mubr.bf16.mxu0 %v2403
    %3038 = vmatmul.mubr.bf16.gmra.mxu0 %v2402
    %v3039 = vpop.f32.mrf.mxu0
    %v3040 = vadd.f32 %v3000, %v3039
    %v3041 = vpop.f32.mrf.mxu0
    %v3042 = vpop.f32.mrf.mxu0
    %v3043 = vpop.f32.mrf.mxu0
    %3044 = vdwg.mxu0
    %3045 = vmatprep.subr.bf16.mxu0 0
    %3046 = vmatpush1.bf16.msra.mxu0 %v2852
    %3047 = vmatprep.subr.bf16.mxu0 0
    %3048 = vmatpush1.bf16.msra.mxu0 %v2851
    %3049 = vmatprep.subr.bf16.mxu0 0
    %3050 = vmatpush1.bf16.msra.mxu0 %v2850
    %3051 = vmatprep.subr.bf16.mxu0 0
    %3052 = vmatpush1.bf16.msra.mxu0 %v2849
    %3053 = vmatprep.subr.bf16.mxu0 0
    %3054 = vmatpush1.bf16.msra.mxu0 %v2848
    %3055 = vmatprep.subr.bf16.mxu0 0
    %3056 = vmatpush1.bf16.msra.mxu0 %v2847
    %3057 = vmatprep.subr.bf16.mxu0 0
    %3058 = vmatpush1.bf16.msra.mxu0 %v2846
    %3059 = vmatprep.subr.bf16.mxu0 0
    %3060 = vmatpush1.bf16.msra.mxu0 %v2845
    %3061 = vmatprep.subr.bf16.mxu0 0
    %3062 = vmatpush2.bf16.msra.mxu0 %v2860
    %3063 = vmatprep.subr.bf16.mxu0 0
    %3064 = vmatpush2.bf16.msra.mxu0 %v2859
    %3065 = vmatprep.subr.bf16.mxu0 0
    %3066 = vmatpush2.bf16.msra.mxu0 %v2858
    %3067 = vmatprep.subr.bf16.mxu0 0
    %3068 = vmatpush2.bf16.msra.mxu0 %v2857
    %3069 = vmatprep.subr.bf16.mxu0 0
    %3070 = vmatpush2.bf16.msra.mxu0 %v2856
    %3071 = vmatprep.subr.bf16.mxu0 0
    %3072 = vmatpush2.bf16.msra.mxu0 %v2855
    %3073 = vmatprep.subr.bf16.mxu0 0
    %3074 = vmatpush2.bf16.msra.mxu0 %v2854
    %3075 = vmatprep.subr.bf16.mxu0 0
    %3076 = vmatpush2.bf16.msra.mxu0 %v2853
    %3077 = vmatprep.mubr.bf16.mxu0 %v2405
    %3078 = vmatmul.mubr.bf16.gmra.mxu0 %v2404
    %v3079 = vpop.f32.mrf.mxu0
    %v3080 = vadd.f32 %v3040, %v3079
    %v3081 = vpop.f32.mrf.mxu0
    %v3082 = vpop.f32.mrf.mxu0
    %v3083 = vpop.f32.mrf.mxu0
    %3084 = vdwg.mxu0
    %3085 = vmax.xlane.f32.xlu0 %v3080
    %v3086 = vpop.xlane.xlu0 %3085
    %v3087 = vsub.f32 %v3080, %v3086
    %v3088 = vmul.f32 %v3087, 1.442695
    %v3089 = vpow.pop %v3088
    %3090 = vadd.xlane.f32.xlu0 %v3089
    %v3091 = vpop.xlane.xlu0 %3090
    %v3092 = vrcp.pop %v3091
    %v3093 = vmul.f32 %v3089, %v3092
    %3094 = vst [vmem:[%s5] sm:$0xff] %v3093
    // Predicated region
    $region38: #{model_finetune_head.1} parent=1 // pred_check
      _
    $region39: #{model_finetune_head.1} parent=1 // pred_check_branch
      %3096 = sbr.rel (0) target = $region41
    $region40: #{model_finetune_head.1} parent=1 // pred_region
      _
    $region41: #{model_finetune_head.1} parent=1 // pred_fallthru
      _
    // Predicated region
    $region42: #{model_finetune_head.1} parent=1 // pred_check
      _
    $region43: #{model_finetune_head.1} parent=1 // pred_check_branch
      %3098 = sbr.rel (0) target = $region45
    $region44: #{model_finetune_head.1} parent=1 // pred_region
      _
    $region45: #{model_finetune_head.1} parent=1 // pred_fallthru
      _
    %3099 = vsyncpa [#allocation3], 1
    %3100 = vsyncpa [#allocation5], 1
    %3101 = vsyncpa [#allocation8], 1

</llo_original>
